<compile_context>
chip_gen: v7x
topology: tpu7x:2x2x1
jax: 0.10.0
libtpu: 0.0.40
codegen_flags: <defaults>
</compile_context>

<pallas_src>
import numpy as np
import jax
import jax.numpy as jnp
from jax.experimental import pallas as pl
from jax.experimental.pallas import tpu as pltpu

B, S = 2, 8
D_MODEL = 32      # input_dim (d_model), divisible by N_HEADS
HIDDEN = 64       # dim_feedforward (hidden_dim)
OUT_SIZE = 8      # output_size
N_HEADS = 2
N_LAYERS = 2
HEAD_DIM = D_MODEL // N_HEADS
LN_EPS = 1e-5
MAX_LEN = 200
SLAB_LANES = 128  # lane-dense packing width for the parameter slab


def _build_layout():
    """Static row offsets (8-aligned) of every parameter inside the slab."""
    off = {}
    rows = 0

    def add(name, nrows):
        nonlocal rows
        off[name] = rows
        rows += ((nrows + 7) // 8) * 8

    add('pe', B)                      # (B, D_MODEL)
    add('wdec', D_MODEL)              # (D_MODEL, OUT_SIZE)
    add('bdec', 1)                    # (1, OUT_SIZE)
    for l in range(N_LAYERS):
        add(f'wqkv{l}', D_MODEL)      # (D, 3D)   [q|k|v] columns, q pre-scaled
        add(f'bqkv{l}', 1)            # (1, 3D)
        add(f'wo{l}', D_MODEL)        # (D, D)    W_o^T
        add(f'bo{l}', 1)              # (1, D)
        add(f'w1{l}', D_MODEL)        # (D, HIDDEN)
        add(f'b1{l}', 1)              # (1, HIDDEN)
        add(f'w2{l}', HIDDEN)         # (HIDDEN, D)
        add(f'b2{l}', 1)              # (1, D)
        add(f'ln1w{l}', 1)
        add(f'ln1b{l}', 1)
        add(f'ln2w{l}', 1)
        add(f'ln2b{l}', 1)
    return off, rows


_OFF, _SLAB_ROWS = _build_layout()    # 496 rows x 128 lanes x f32 ~= 254 KB


def _ln(x, w, b):
    mu = jnp.mean(x, axis=-1, keepdims=True)
    var = jnp.mean((x - mu) ** 2, axis=-1, keepdims=True)
    return (x - mu) * jax.lax.rsqrt(var + LN_EPS) * w + b


def transformer_kernel(x_ref, w_ref, out_ref):
    # TODO(synk): dropout (p=0.1) is a no-op in eval mode, so it is omitted.
    # pe[:batch] indexing of the seq-first buffer is intentionally preserved.
    def vec(name, cols):
        o = _OFF[name]
        return w_ref[o:o + 1, 0:cols]                              # (1, cols)

    def mat(name, nrows, cols):
        o = _OFF[name]
        return w_ref[o:o + nrows, 0:cols]                          # (nrows, cols)

    pe = mat('pe', B, D_MODEL)                                     # (B, D)
    x = (x_ref[...] + pe[:, None, :]).reshape(B * S, D_MODEL)      # (16, 32)

    for l in range(N_LAYERS):
        # ---- multi-head self-attention (post-norm, PyTorch defaults) ----
        # One fused QKV matmul; 1/sqrt(head_dim) is already folded into Wq/bq.
        wqkv = mat(f'wqkv{l}', D_MODEL, 3 * D_MODEL)               # (32, 96)
        bqkv = vec(f'bqkv{l}', 3 * D_MODEL)                        # (1, 96)
        qkv = jnp.dot(x, wqkv, preferred_element_type=jnp.float32) + bqkv  # (16, 96)

        # Heads = lane slices of the 96-lane result, regrouped into one
        # (head*batch)-batched axis for scores / PV.
        def heads(base):
            parts = [qkv[:, base + h * HEAD_DIM: base + (h + 1) * HEAD_DIM]
                     for h in range(N_HEADS)]
            return jnp.stack(parts, axis=0).reshape(N_HEADS * B, S, HEAD_DIM)

        q = heads(0)                                               # (4, 8, 16)
        k = heads(D_MODEL)
        v = heads(2 * D_MODEL)

        scores = jnp.einsum('gqd,gkd->gqk', q, k,
                            preferred_element_type=jnp.float32)    # (4, 8, 8)
        scores = scores - jnp.max(scores, axis=-1, keepdims=True)
        p = jnp.exp(scores)
        p = p * pl.reciprocal(jnp.sum(p, axis=-1, keepdims=True), approx=False)
        o = jnp.einsum('gqk,gkd->gqd', p, v,
                       preferred_element_type=jnp.float32)         # (4, 8, 16)

        # Fused output projection: lane-concat heads back to (16,32) and hit the
        # MXU once against the full W_o^T; bias added once.
        o_cat = jnp.concatenate(
            [o[h * B:(h + 1) * B].reshape(B * S, HEAD_DIM) for h in range(N_HEADS)],
            axis=-1)                                               # (16, 32)
        wo = mat(f'wo{l}', D_MODEL, D_MODEL)                       # (32, 32) = W_o^T
        attn = jnp.dot(o_cat, wo, preferred_element_type=jnp.float32) + vec(f'bo{l}', D_MODEL)

        x = _ln(x + attn, vec(f'ln1w{l}', D_MODEL), vec(f'ln1b{l}', D_MODEL))

        # ---- feed-forward (ReLU) ----
        w1 = mat(f'w1{l}', D_MODEL, HIDDEN)                        # (32, 64)
        h1 = jnp.dot(x, w1, preferred_element_type=jnp.float32) + vec(f'b1{l}', HIDDEN)
        h1 = jnp.maximum(h1, 0.0)
        w2 = mat(f'w2{l}', HIDDEN, D_MODEL)                        # (64, 32)
        ff = jnp.dot(h1, w2, preferred_element_type=jnp.float32) + vec(f'b2{l}', D_MODEL)
        x = _ln(x + ff, vec(f'ln2w{l}', D_MODEL), vec(f'ln2b{l}', D_MODEL))

    # ---- decoder on last time step + softmax ----
    last = x.reshape(B, S, D_MODEL)[:, S - 1, :]                   # (2, 32)
    wdec = mat('wdec', D_MODEL, OUT_SIZE)                          # (32, 8)
    logits = jnp.dot(last, wdec, preferred_element_type=jnp.float32) + vec('bdec', OUT_SIZE)
    logits = logits - jnp.max(logits, axis=-1, keepdims=True)
    e = jnp.exp(logits)
    out_ref[...] = e * pl.reciprocal(jnp.sum(e, axis=-1, keepdims=True), approx=False)


def make_pe():
    pos = np.arange(MAX_LEN, dtype=np.float32)[:, None]
    div = np.exp(np.arange(0, D_MODEL, 2, dtype=np.float32) * (-np.log(10000.0) / D_MODEL))
    pe = np.zeros((MAX_LEN, D_MODEL), np.float32)
    pe[:, 0::2] = np.sin(pos * div)
    pe[:, 1::2] = np.cos(pos * div)
    return jnp.asarray(pe)                                         # (MAX_LEN, D)


def init_params(key):
    # PyTorch-layout parameters (out_features, in_features); used by the reference.
    ks = jax.random.split(key, 10)
    n = lambda k, shape: 0.05 * jax.random.normal(k, shape, jnp.float32)
    p = {}
    p['wqkv'] = n(ks[0], (N_LAYERS, 3 * D_MODEL, D_MODEL))
    p['bqkv'] = n(ks[1], (N_LAYERS, 3 * D_MODEL))
    p['wo']   = n(ks[2], (N_LAYERS, D_MODEL, D_MODEL))
    p['bo']   = n(ks[3], (N_LAYERS, D_MODEL))
    p['w1']   = n(ks[4], (N_LAYERS, HIDDEN, D_MODEL))
    p['b1']   = n(ks[5], (N_LAYERS, HIDDEN))
    p['w2']   = n(ks[6], (N_LAYERS, D_MODEL, HIDDEN))
    p['b2']   = n(ks[7], (N_LAYERS, D_MODEL))
    p['ln1w'] = jnp.ones((N_LAYERS, D_MODEL), jnp.float32)
    p['ln1b'] = jnp.zeros((N_LAYERS, D_MODEL), jnp.float32)
    p['ln2w'] = jnp.ones((N_LAYERS, D_MODEL), jnp.float32)
    p['ln2b'] = jnp.zeros((N_LAYERS, D_MODEL), jnp.float32)
    p['wdec'] = n(ks[8], (OUT_SIZE, D_MODEL))
    p['bdec'] = n(ks[9], (OUT_SIZE,))
    return p


def prepare_kernel_params(params, pe):
    """One-time repack of all PyTorch-layout params into a single (rows, 128) slab.

    Done once at init (not in the per-call wrapper): transposes, attention-scale
    folding and padding never run on the forward path, and the kernel sees
    exactly one weight operand.
    """
    slab = np.zeros((_SLAB_ROWS, SLAB_LANES), np.float32)

    def put(name, arr):
        arr = np.asarray(arr, np.float32)
        if arr.ndim == 1:
            arr = arr[None, :]
        r, c = arr.shape
        o = _OFF[name]
        slab[o:o + r, 0:c] = arr

    scale = 1.0 / np.sqrt(HEAD_DIM)
    put('pe', np.asarray(pe)[:B])                                  # (B, D)
    put('wdec', np.asarray(params['wdec']).T)                      # (D, OUT)
    put('bdec', np.asarray(params['bdec']))
    for l in range(N_LAYERS):
        wqkv = np.asarray(params['wqkv'][l]).T.copy()              # (D, 3D) cols [q|k|v]
        bqkv = np.asarray(params['bqkv'][l]).copy()                # (3D,)
        wqkv[:, :D_MODEL] *= scale                                 # fold 1/sqrt(hd) into q
        bqkv[:D_MODEL] *= scale
        put(f'wqkv{l}', wqkv)
        put(f'bqkv{l}', bqkv)
        put(f'wo{l}', np.asarray(params['wo'][l]).T)               # W_o^T (D, D)
        put(f'bo{l}', np.asarray(params['bo'][l]))
        put(f'w1{l}', np.asarray(params['w1'][l]).T)               # (D, HIDDEN)
        put(f'b1{l}', np.asarray(params['b1'][l]))
        put(f'w2{l}', np.asarray(params['w2'][l]).T)               # (HIDDEN, D)
        put(f'b2{l}', np.asarray(params['b2'][l]))
        put(f'ln1w{l}', np.asarray(params['ln1w'][l]))
        put(f'ln1b{l}', np.asarray(params['ln1b'][l]))
        put(f'ln2w{l}', np.asarray(params['ln2w'][l]))
        put(f'ln2b{l}', np.asarray(params['ln2b'][l]))
    return jnp.asarray(slab)


@jax.jit
def stock_price_transformer(src, weight_slab):
    vmem = pltpu.MemorySpace.VMEM
    return pl.pallas_call(
        transformer_kernel,
        out_shape=jax.ShapeDtypeStruct((B, OUT_SIZE), jnp.float32),
        in_specs=[pl.BlockSpec(memory_space=vmem),     # whole input in VMEM
                  pl.BlockSpec(memory_space=vmem)],    # whole weight slab in VMEM
        out_specs=pl.BlockSpec(memory_space=vmem),
    )(src, weight_slab)


def reference_forward(src, p, pe):
    """Pure-JAX reference mirroring PyTorch eval-mode semantics."""
    x = src + pe[:B][:, None, :]
    for l in range(N_LAYERS):
        qkv = x @ p['wqkv'][l].T + p['bqkv'][l]
        q, k, v = jnp.split(qkv, 3, axis=-1)

        def split_heads(t):
            return t.reshape(B, S, N_HEADS, HEAD_DIM).transpose(0, 2, 1, 3)

        qh, kh, vh = split_heads(q), split_heads(k), split_heads(v)
        sc = jnp.einsum('bhqd,bhkd->bhqk', qh, kh) / np.sqrt(HEAD_DIM)
        pr = jax.nn.softmax(sc, axis=-1)
        o = jnp.einsum('bhqk,bhkd->bhqd', pr, vh).transpose(0, 2, 1, 3).reshape(B, S, D_MODEL)
        attn = o @ p['wo'][l].T + p['bo'][l]
        x = _ln(x + attn, p['ln1w'][l], p['ln1b'][l])
        ff = jax.nn.relu(x @ p['w1'][l].T + p['b1'][l]) @ p['w2'][l].T + p['b2'][l]
        x = _ln(x + ff, p['ln2w'][l], p['ln2b'][l])
    logits = x[:, -1, :] @ p['wdec'].T + p['bdec']
    return jax.nn.softmax(logits, axis=-1)


if __name__ == "__main__":
    key = jax.random.PRNGKey(0)
    kx, kparam = jax.random.split(key)
    src = jax.random.normal(kx, (B, S, D_MODEL), jnp.float32)
    params = init_params(kparam)
    pe = make_pe()
    weight_slab = prepare_kernel_params(params, pe)   # one-time repack, off the forward path

    out = jax.block_until_ready(stock_price_transformer(src, weight_slab))
    ref = jax.block_until_ready(reference_forward(src, params, pe))

    assert out.shape == (B, OUT_SIZE)
    np.testing.assert_allclose(np.asarray(out), np.asarray(ref), rtol=1e-4, atol=1e-5)
    print("KERNEL_OK")
</pallas_src>

<mosaic_0001>
module attributes {stable_mosaic.version = 11 : i64} {
  func.func @transformer_kernel(%arg0: memref<2x8x32xf32, #tpu.memory_space<vmem>>, %arg1: memref<496x128xf32, #tpu.memory_space<vmem>>, %arg2: memref<2x8xf32, #tpu.memory_space<vmem>>) attributes {dimension_semantics = [], scalar_prefetch = 0 : i64, scratch_operands = 0 : i64, tpu.core_type = #tpu.core_type<tc>} {
    %c0 = arith.constant 0 : index
    %c0_0 = arith.constant 0 : index
    %0 = vector.load %arg1[%c0, %c0_0] : memref<496x128xf32, #tpu.memory_space<vmem>>, vector<2x32xf32>
    %c0_1 = arith.constant 0 : index
    %c0_2 = arith.constant 0 : index
    %c0_3 = arith.constant 0 : index
    %1 = vector.load %arg0[%c0_1, %c0_2, %c0_3] : memref<2x8x32xf32, #tpu.memory_space<vmem>>, vector<2x8x32xf32>
    %2 = vector.shape_cast %0 : vector<2x32xf32> to vector<2x1x32xf32>
    %3 = vector.broadcast %2 : vector<2x1x32xf32> to vector<2x8x32xf32>
    %4 = arith.addf %1, %3 : vector<2x8x32xf32>
    %5 = vector.shape_cast %4 : vector<2x8x32xf32> to vector<16x32xf32>
    %c48 = arith.constant 48 : index
    %c0_4 = arith.constant 0 : index
    %6 = vector.load %arg1[%c48, %c0_4] : memref<496x128xf32, #tpu.memory_space<vmem>>, vector<32x96xf32>
    %c80 = arith.constant 80 : index
    %c0_5 = arith.constant 0 : index
    %7 = vector.load %arg1[%c80, %c0_5] : memref<496x128xf32, #tpu.memory_space<vmem>>, vector<1x96xf32>
    %cst = arith.constant dense<0.000000e+00> : vector<16x96xf32>
    %8 = tpu.matmul %5, %6, %cst {dimension_numbers = #tpu.dot_dimension_numbers<[1], [0], [0], [1], [0, 0, 1, 1], [], []>} : vector<16x32xf32>, vector<32x96xf32>, vector<16x96xf32> -> vector<16x96xf32>
    %9 = vector.broadcast %7 : vector<1x96xf32> to vector<16x96xf32>
    %10 = arith.addf %8, %9 : vector<16x96xf32>
    %11 = vector.extract_strided_slice %10 {offsets = [0, 0], sizes = [16, 16], strides = [1, 1]} : vector<16x96xf32> to vector<16x16xf32>
    %12 = vector.extract_strided_slice %10 {offsets = [0, 16], sizes = [16, 16], strides = [1, 1]} : vector<16x96xf32> to vector<16x16xf32>
    %13 = vector.shape_cast %11 : vector<16x16xf32> to vector<1x16x16xf32>
    %14 = vector.shape_cast %12 : vector<16x16xf32> to vector<1x16x16xf32>
    %15 = tpu.concatenate %13, %14 in 0 : vector<1x16x16xf32>, vector<1x16x16xf32> -> vector<2x16x16xf32>
    %16 = vector.shape_cast %15 : vector<2x16x16xf32> to vector<4x8x16xf32>
    %17 = vector.extract_strided_slice %10 {offsets = [0, 32], sizes = [16, 16], strides = [1, 1]} : vector<16x96xf32> to vector<16x16xf32>
    %18 = vector.extract_strided_slice %10 {offsets = [0, 48], sizes = [16, 16], strides = [1, 1]} : vector<16x96xf32> to vector<16x16xf32>
    %19 = vector.shape_cast %17 : vector<16x16xf32> to vector<1x16x16xf32>
    %20 = vector.shape_cast %18 : vector<16x16xf32> to vector<1x16x16xf32>
    %21 = tpu.concatenate %19, %20 in 0 : vector<1x16x16xf32>, vector<1x16x16xf32> -> vector<2x16x16xf32>
    %22 = vector.shape_cast %21 : vector<2x16x16xf32> to vector<4x8x16xf32>
    %23 = vector.extract_strided_slice %10 {offsets = [0, 64], sizes = [16, 16], strides = [1, 1]} : vector<16x96xf32> to vector<16x16xf32>
    %24 = vector.extract_strided_slice %10 {offsets = [0, 80], sizes = [16, 16], strides = [1, 1]} : vector<16x96xf32> to vector<16x16xf32>
    %25 = vector.shape_cast %23 : vector<16x16xf32> to vector<1x16x16xf32>
    %26 = vector.shape_cast %24 : vector<16x16xf32> to vector<1x16x16xf32>
    %27 = tpu.concatenate %25, %26 in 0 : vector<1x16x16xf32>, vector<1x16x16xf32> -> vector<2x16x16xf32>
    %28 = vector.shape_cast %27 : vector<2x16x16xf32> to vector<4x8x16xf32>
    "tpu.trace_start"() <{level = 10 : i32, message = "gqd,gkd->gqk"}> : () -> ()
    %cst_6 = arith.constant dense<0.000000e+00> : vector<4x8x8xf32>
    %29 = tpu.matmul %16, %22, %cst_6 {dimension_numbers = #tpu.dot_dimension_numbers<[2], [2], [1], [1], [0, 0, 0, 1, 1, 1], [0], [0]>} : vector<4x8x16xf32>, vector<4x8x16xf32>, vector<4x8x8xf32> -> vector<4x8x8xf32>
    "tpu.trace_stop"() : () -> ()
    %cst_7 = arith.constant dense<0xFF800000> : vector<4x8xf32>
    %30 = vector.multi_reduction <maximumf>, %29, %cst_7 [2] : vector<4x8x8xf32> to vector<4x8xf32>
    %31 = vector.shape_cast %30 : vector<4x8xf32> to vector<4x8x1xf32>
    %32 = vector.broadcast %31 : vector<4x8x1xf32> to vector<4x8x8xf32>
    %33 = arith.subf %29, %32 : vector<4x8x8xf32>
    %34 = math.exp %33 : vector<4x8x8xf32>
    %cst_8 = arith.constant dense<0.000000e+00> : vector<4x8xf32>
    %35 = vector.multi_reduction <add>, %34, %cst_8 [2] : vector<4x8x8xf32> to vector<4x8xf32>
    %36 = vector.shape_cast %35 : vector<4x8xf32> to vector<4x8x1xf32>
    %37 = tpu.reciprocal %36 : vector<4x8x1xf32> -> vector<4x8x1xf32>
    %38 = vector.broadcast %37 : vector<4x8x1xf32> to vector<4x8x8xf32>
    %39 = arith.mulf %34, %38 : vector<4x8x8xf32>
    "tpu.trace_start"() <{level = 10 : i32, message = "gqk,gkd->gqd"}> : () -> ()
    %cst_9 = arith.constant dense<0.000000e+00> : vector<4x8x16xf32>
    %40 = tpu.matmul %39, %28, %cst_9 {dimension_numbers = #tpu.dot_dimension_numbers<[2], [1], [1], [2], [0, 0, 0, 1, 1, 2], [0], [0]>} : vector<4x8x8xf32>, vector<4x8x16xf32>, vector<4x8x16xf32> -> vector<4x8x16xf32>
    "tpu.trace_stop"() : () -> ()
    %41 = vector.extract_strided_slice %40 {offsets = [0, 0, 0], sizes = [2, 8, 16], strides = [1, 1, 1]} : vector<4x8x16xf32> to vector<2x8x16xf32>
    %42 = vector.shape_cast %41 : vector<2x8x16xf32> to vector<16x16xf32>
    %43 = vector.extract_strided_slice %40 {offsets = [2, 0, 0], sizes = [2, 8, 16], strides = [1, 1, 1]} : vector<4x8x16xf32> to vector<2x8x16xf32>
    %44 = vector.shape_cast %43 : vector<2x8x16xf32> to vector<16x16xf32>
    %45 = tpu.concatenate %42, %44 in 1 : vector<16x16xf32>, vector<16x16xf32> -> vector<16x32xf32>
    %c88 = arith.constant 88 : index
    %c0_10 = arith.constant 0 : index
    %46 = vector.load %arg1[%c88, %c0_10] : memref<496x128xf32, #tpu.memory_space<vmem>>, vector<32x32xf32>
    %cst_11 = arith.constant dense<0.000000e+00> : vector<16x32xf32>
    %47 = tpu.matmul %45, %46, %cst_11 {dimension_numbers = #tpu.dot_dimension_numbers<[1], [0], [0], [1], [0, 0, 1, 1], [], []>} : vector<16x32xf32>, vector<32x32xf32>, vector<16x32xf32> -> vector<16x32xf32>
    %c120 = arith.constant 120 : index
    %c0_12 = arith.constant 0 : index
    %48 = vector.load %arg1[%c120, %c0_12] : memref<496x128xf32, #tpu.memory_space<vmem>>, vector<1x32xf32>
    %49 = vector.broadcast %48 : vector<1x32xf32> to vector<16x32xf32>
    %50 = arith.addf %47, %49 : vector<16x32xf32>
    %51 = arith.addf %5, %50 : vector<16x32xf32>
    %c240 = arith.constant 240 : index
    %c0_13 = arith.constant 0 : index
    %52 = vector.load %arg1[%c240, %c0_13] : memref<496x128xf32, #tpu.memory_space<vmem>>, vector<1x32xf32>
    %c248 = arith.constant 248 : index
    %c0_14 = arith.constant 0 : index
    %53 = vector.load %arg1[%c248, %c0_14] : memref<496x128xf32, #tpu.memory_space<vmem>>, vector<1x32xf32>
    %cst_15 = arith.constant dense<0.000000e+00> : vector<16xf32>
    %54 = vector.multi_reduction <add>, %51, %cst_15 [1] : vector<16x32xf32> to vector<16xf32>
    %55 = vector.shape_cast %54 : vector<16xf32> to vector<16x1xf32>
    %cst_16 = arith.constant 3.200000e+01 : f32
    %56 = vector.broadcast %cst_16 : f32 to vector<16x1xf32>
    %57 = arith.divf %55, %56 : vector<16x1xf32>
    %58 = vector.broadcast %57 : vector<16x1xf32> to vector<16x32xf32>
    %59 = arith.subf %51, %58 : vector<16x32xf32>
    %60 = arith.mulf %59, %59 : vector<16x32xf32>
    %cst_17 = arith.constant dense<0.000000e+00> : vector<16xf32>
    %61 = vector.multi_reduction <add>, %60, %cst_17 [1] : vector<16x32xf32> to vector<16xf32>
    %62 = vector.shape_cast %61 : vector<16xf32> to vector<16x1xf32>
    %cst_18 = arith.constant 3.200000e+01 : f32
    %63 = vector.broadcast %cst_18 : f32 to vector<16x1xf32>
    %64 = arith.divf %62, %63 : vector<16x1xf32>
    %65 = vector.broadcast %57 : vector<16x1xf32> to vector<16x32xf32>
    %66 = arith.subf %51, %65 : vector<16x32xf32>
    %cst_19 = arith.constant 9.99999974E-6 : f32
    %67 = vector.broadcast %cst_19 : f32 to vector<16x1xf32>
    %68 = arith.addf %64, %67 : vector<16x1xf32>
    %69 = math.rsqrt %68 : vector<16x1xf32>
    %70 = vector.broadcast %69 : vector<16x1xf32> to vector<16x32xf32>
    %71 = arith.mulf %66, %70 : vector<16x32xf32>
    %72 = vector.broadcast %52 : vector<1x32xf32> to vector<16x32xf32>
    %73 = arith.mulf %71, %72 : vector<16x32xf32>
    %74 = vector.broadcast %53 : vector<1x32xf32> to vector<16x32xf32>
    %75 = arith.addf %73, %74 : vector<16x32xf32>
    %c128 = arith.constant 128 : index
    %c0_20 = arith.constant 0 : index
    %76 = vector.load %arg1[%c128, %c0_20] : memref<496x128xf32, #tpu.memory_space<vmem>>, vector<32x64xf32>
    %cst_21 = arith.constant dense<0.000000e+00> : vector<16x64xf32>
    %77 = tpu.matmul %75, %76, %cst_21 {dimension_numbers = #tpu.dot_dimension_numbers<[1], [0], [0], [1], [0, 0, 1, 1], [], []>} : vector<16x32xf32>, vector<32x64xf32>, vector<16x64xf32> -> vector<16x64xf32>
    %c160 = arith.constant 160 : index
    %c0_22 = arith.constant 0 : index
    %78 = vector.load %arg1[%c160, %c0_22] : memref<496x128xf32, #tpu.memory_space<vmem>>, vector<1x64xf32>
    %79 = vector.broadcast %78 : vector<1x64xf32> to vector<16x64xf32>
    %80 = arith.addf %77, %79 : vector<16x64xf32>
    %cst_23 = arith.constant 0.000000e+00 : f32
    %81 = vector.broadcast %cst_23 : f32 to vector<16x64xf32>
    %82 = arith.maximumf %80, %81 : vector<16x64xf32>
    %c168 = arith.constant 168 : index
    %c0_24 = arith.constant 0 : index
    %83 = vector.load %arg1[%c168, %c0_24] : memref<496x128xf32, #tpu.memory_space<vmem>>, vector<64x32xf32>
    %cst_25 = arith.constant dense<0.000000e+00> : vector<16x32xf32>
    %84 = tpu.matmul %82, %83, %cst_25 {dimension_numbers = #tpu.dot_dimension_numbers<[1], [0], [0], [1], [0, 0, 1, 1], [], []>} : vector<16x64xf32>, vector<64x32xf32>, vector<16x32xf32> -> vector<16x32xf32>
    %c232 = arith.constant 232 : index
    %c0_26 = arith.constant 0 : index
    %85 = vector.load %arg1[%c232, %c0_26] : memref<496x128xf32, #tpu.memory_space<vmem>>, vector<1x32xf32>
    %86 = vector.broadcast %85 : vector<1x32xf32> to vector<16x32xf32>
    %87 = arith.addf %84, %86 : vector<16x32xf32>
    %88 = arith.addf %75, %87 : vector<16x32xf32>
    %c256 = arith.constant 256 : index
    %c0_27 = arith.constant 0 : index
    %89 = vector.load %arg1[%c256, %c0_27] : memref<496x128xf32, #tpu.memory_space<vmem>>, vector<1x32xf32>
    %c264 = arith.constant 264 : index
    %c0_28 = arith.constant 0 : index
    %90 = vector.load %arg1[%c264, %c0_28] : memref<496x128xf32, #tpu.memory_space<vmem>>, vector<1x32xf32>
    %cst_29 = arith.constant dense<0.000000e+00> : vector<16xf32>
    %91 = vector.multi_reduction <add>, %88, %cst_29 [1] : vector<16x32xf32> to vector<16xf32>
    %92 = vector.shape_cast %91 : vector<16xf32> to vector<16x1xf32>
    %cst_30 = arith.constant 3.200000e+01 : f32
    %93 = vector.broadcast %cst_30 : f32 to vector<16x1xf32>
    %94 = arith.divf %92, %93 : vector<16x1xf32>
    %95 = vector.broadcast %94 : vector<16x1xf32> to vector<16x32xf32>
    %96 = arith.subf %88, %95 : vector<16x32xf32>
    %97 = arith.mulf %96, %96 : vector<16x32xf32>
    %cst_31 = arith.constant dense<0.000000e+00> : vector<16xf32>
    %98 = vector.multi_reduction <add>, %97, %cst_31 [1] : vector<16x32xf32> to vector<16xf32>
    %99 = vector.shape_cast %98 : vector<16xf32> to vector<16x1xf32>
    %cst_32 = arith.constant 3.200000e+01 : f32
    %100 = vector.broadcast %cst_32 : f32 to vector<16x1xf32>
    %101 = arith.divf %99, %100 : vector<16x1xf32>
    %102 = vector.broadcast %94 : vector<16x1xf32> to vector<16x32xf32>
    %103 = arith.subf %88, %102 : vector<16x32xf32>
    %cst_33 = arith.constant 9.99999974E-6 : f32
    %104 = vector.broadcast %cst_33 : f32 to vector<16x1xf32>
    %105 = arith.addf %101, %104 : vector<16x1xf32>
    %106 = math.rsqrt %105 : vector<16x1xf32>
    %107 = vector.broadcast %106 : vector<16x1xf32> to vector<16x32xf32>
    %108 = arith.mulf %103, %107 : vector<16x32xf32>
    %109 = vector.broadcast %89 : vector<1x32xf32> to vector<16x32xf32>
    %110 = arith.mulf %108, %109 : vector<16x32xf32>
    %111 = vector.broadcast %90 : vector<1x32xf32> to vector<16x32xf32>
    %112 = arith.addf %110, %111 : vector<16x32xf32>
    %c272 = arith.constant 272 : index
    %c0_34 = arith.constant 0 : index
    %113 = vector.load %arg1[%c272, %c0_34] : memref<496x128xf32, #tpu.memory_space<vmem>>, vector<32x96xf32>
    %c304 = arith.constant 304 : index
    %c0_35 = arith.constant 0 : index
    %114 = vector.load %arg1[%c304, %c0_35] : memref<496x128xf32, #tpu.memory_space<vmem>>, vector<1x96xf32>
    %cst_36 = arith.constant dense<0.000000e+00> : vector<16x96xf32>
    %115 = tpu.matmul %112, %113, %cst_36 {dimension_numbers = #tpu.dot_dimension_numbers<[1], [0], [0], [1], [0, 0, 1, 1], [], []>} : vector<16x32xf32>, vector<32x96xf32>, vector<16x96xf32> -> vector<16x96xf32>
    %116 = vector.broadcast %114 : vector<1x96xf32> to vector<16x96xf32>
    %117 = arith.addf %115, %116 : vector<16x96xf32>
    %118 = vector.extract_strided_slice %117 {offsets = [0, 0], sizes = [16, 16], strides = [1, 1]} : vector<16x96xf32> to vector<16x16xf32>
    %119 = vector.extract_strided_slice %117 {offsets = [0, 16], sizes = [16, 16], strides = [1, 1]} : vector<16x96xf32> to vector<16x16xf32>
    %120 = vector.shape_cast %118 : vector<16x16xf32> to vector<1x16x16xf32>
    %121 = vector.shape_cast %119 : vector<16x16xf32> to vector<1x16x16xf32>
    %122 = tpu.concatenate %120, %121 in 0 : vector<1x16x16xf32>, vector<1x16x16xf32> -> vector<2x16x16xf32>
    %123 = vector.shape_cast %122 : vector<2x16x16xf32> to vector<4x8x16xf32>
    %124 = vector.extract_strided_slice %117 {offsets = [0, 32], sizes = [16, 16], strides = [1, 1]} : vector<16x96xf32> to vector<16x16xf32>
    %125 = vector.extract_strided_slice %117 {offsets = [0, 48], sizes = [16, 16], strides = [1, 1]} : vector<16x96xf32> to vector<16x16xf32>
    %126 = vector.shape_cast %124 : vector<16x16xf32> to vector<1x16x16xf32>
    %127 = vector.shape_cast %125 : vector<16x16xf32> to vector<1x16x16xf32>
    %128 = tpu.concatenate %126, %127 in 0 : vector<1x16x16xf32>, vector<1x16x16xf32> -> vector<2x16x16xf32>
    %129 = vector.shape_cast %128 : vector<2x16x16xf32> to vector<4x8x16xf32>
    %130 = vector.extract_strided_slice %117 {offsets = [0, 64], sizes = [16, 16], strides = [1, 1]} : vector<16x96xf32> to vector<16x16xf32>
    %131 = vector.extract_strided_slice %117 {offsets = [0, 80], sizes = [16, 16], strides = [1, 1]} : vector<16x96xf32> to vector<16x16xf32>
    %132 = vector.shape_cast %130 : vector<16x16xf32> to vector<1x16x16xf32>
    %133 = vector.shape_cast %131 : vector<16x16xf32> to vector<1x16x16xf32>
    %134 = tpu.concatenate %132, %133 in 0 : vector<1x16x16xf32>, vector<1x16x16xf32> -> vector<2x16x16xf32>
    %135 = vector.shape_cast %134 : vector<2x16x16xf32> to vector<4x8x16xf32>
    "tpu.trace_start"() <{level = 10 : i32, message = "gqd,gkd->gqk"}> : () -> ()
    %cst_37 = arith.constant dense<0.000000e+00> : vector<4x8x8xf32>
    %136 = tpu.matmul %123, %129, %cst_37 {dimension_numbers = #tpu.dot_dimension_numbers<[2], [2], [1], [1], [0, 0, 0, 1, 1, 1], [0], [0]>} : vector<4x8x16xf32>, vector<4x8x16xf32>, vector<4x8x8xf32> -> vector<4x8x8xf32>
    "tpu.trace_stop"() : () -> ()
    %cst_38 = arith.constant dense<0xFF800000> : vector<4x8xf32>
    %137 = vector.multi_reduction <maximumf>, %136, %cst_38 [2] : vector<4x8x8xf32> to vector<4x8xf32>
    %138 = vector.shape_cast %137 : vector<4x8xf32> to vector<4x8x1xf32>
    %139 = vector.broadcast %138 : vector<4x8x1xf32> to vector<4x8x8xf32>
    %140 = arith.subf %136, %139 : vector<4x8x8xf32>
    %141 = math.exp %140 : vector<4x8x8xf32>
    %cst_39 = arith.constant dense<0.000000e+00> : vector<4x8xf32>
    %142 = vector.multi_reduction <add>, %141, %cst_39 [2] : vector<4x8x8xf32> to vector<4x8xf32>
    %143 = vector.shape_cast %142 : vector<4x8xf32> to vector<4x8x1xf32>
    %144 = tpu.reciprocal %143 : vector<4x8x1xf32> -> vector<4x8x1xf32>
    %145 = vector.broadcast %144 : vector<4x8x1xf32> to vector<4x8x8xf32>
    %146 = arith.mulf %141, %145 : vector<4x8x8xf32>
    "tpu.trace_start"() <{level = 10 : i32, message = "gqk,gkd->gqd"}> : () -> ()
    %cst_40 = arith.constant dense<0.000000e+00> : vector<4x8x16xf32>
    %147 = tpu.matmul %146, %135, %cst_40 {dimension_numbers = #tpu.dot_dimension_numbers<[2], [1], [1], [2], [0, 0, 0, 1, 1, 2], [0], [0]>} : vector<4x8x8xf32>, vector<4x8x16xf32>, vector<4x8x16xf32> -> vector<4x8x16xf32>
    "tpu.trace_stop"() : () -> ()
    %148 = vector.extract_strided_slice %147 {offsets = [0, 0, 0], sizes = [2, 8, 16], strides = [1, 1, 1]} : vector<4x8x16xf32> to vector<2x8x16xf32>
    %149 = vector.shape_cast %148 : vector<2x8x16xf32> to vector<16x16xf32>
    %150 = vector.extract_strided_slice %147 {offsets = [2, 0, 0], sizes = [2, 8, 16], strides = [1, 1, 1]} : vector<4x8x16xf32> to vector<2x8x16xf32>
    %151 = vector.shape_cast %150 : vector<2x8x16xf32> to vector<16x16xf32>
    %152 = tpu.concatenate %149, %151 in 1 : vector<16x16xf32>, vector<16x16xf32> -> vector<16x32xf32>
    %c312 = arith.constant 312 : index
    %c0_41 = arith.constant 0 : index
    %153 = vector.load %arg1[%c312, %c0_41] : memref<496x128xf32, #tpu.memory_space<vmem>>, vector<32x32xf32>
    %cst_42 = arith.constant dense<0.000000e+00> : vector<16x32xf32>
    %154 = tpu.matmul %152, %153, %cst_42 {dimension_numbers = #tpu.dot_dimension_numbers<[1], [0], [0], [1], [0, 0, 1, 1], [], []>} : vector<16x32xf32>, vector<32x32xf32>, vector<16x32xf32> -> vector<16x32xf32>
    %c344 = arith.constant 344 : index
    %c0_43 = arith.constant 0 : index
    %155 = vector.load %arg1[%c344, %c0_43] : memref<496x128xf32, #tpu.memory_space<vmem>>, vector<1x32xf32>
    %156 = vector.broadcast %155 : vector<1x32xf32> to vector<16x32xf32>
    %157 = arith.addf %154, %156 : vector<16x32xf32>
    %158 = arith.addf %112, %157 : vector<16x32xf32>
    %c464 = arith.constant 464 : index
    %c0_44 = arith.constant 0 : index
    %159 = vector.load %arg1[%c464, %c0_44] : memref<496x128xf32, #tpu.memory_space<vmem>>, vector<1x32xf32>
    %c472 = arith.constant 472 : index
    %c0_45 = arith.constant 0 : index
    %160 = vector.load %arg1[%c472, %c0_45] : memref<496x128xf32, #tpu.memory_space<vmem>>, vector<1x32xf32>
    %cst_46 = arith.constant dense<0.000000e+00> : vector<16xf32>
    %161 = vector.multi_reduction <add>, %158, %cst_46 [1] : vector<16x32xf32> to vector<16xf32>
    %162 = vector.shape_cast %161 : vector<16xf32> to vector<16x1xf32>
    %cst_47 = arith.constant 3.200000e+01 : f32
    %163 = vector.broadcast %cst_47 : f32 to vector<16x1xf32>
    %164 = arith.divf %162, %163 : vector<16x1xf32>
    %165 = vector.broadcast %164 : vector<16x1xf32> to vector<16x32xf32>
    %166 = arith.subf %158, %165 : vector<16x32xf32>
    %167 = arith.mulf %166, %166 : vector<16x32xf32>
    %cst_48 = arith.constant dense<0.000000e+00> : vector<16xf32>
    %168 = vector.multi_reduction <add>, %167, %cst_48 [1] : vector<16x32xf32> to vector<16xf32>
    %169 = vector.shape_cast %168 : vector<16xf32> to vector<16x1xf32>
    %cst_49 = arith.constant 3.200000e+01 : f32
    %170 = vector.broadcast %cst_49 : f32 to vector<16x1xf32>
    %171 = arith.divf %169, %170 : vector<16x1xf32>
    %172 = vector.broadcast %164 : vector<16x1xf32> to vector<16x32xf32>
    %173 = arith.subf %158, %172 : vector<16x32xf32>
    %cst_50 = arith.constant 9.99999974E-6 : f32
    %174 = vector.broadcast %cst_50 : f32 to vector<16x1xf32>
    %175 = arith.addf %171, %174 : vector<16x1xf32>
    %176 = math.rsqrt %175 : vector<16x1xf32>
    %177 = vector.broadcast %176 : vector<16x1xf32> to vector<16x32xf32>
    %178 = arith.mulf %173, %177 : vector<16x32xf32>
    %179 = vector.broadcast %159 : vector<1x32xf32> to vector<16x32xf32>
    %180 = arith.mulf %178, %179 : vector<16x32xf32>
    %181 = vector.broadcast %160 : vector<1x32xf32> to vector<16x32xf32>
    %182 = arith.addf %180, %181 : vector<16x32xf32>
    %c352 = arith.constant 352 : index
    %c0_51 = arith.constant 0 : index
    %183 = vector.load %arg1[%c352, %c0_51] : memref<496x128xf32, #tpu.memory_space<vmem>>, vector<32x64xf32>
    %cst_52 = arith.constant dense<0.000000e+00> : vector<16x64xf32>
    %184 = tpu.matmul %182, %183, %cst_52 {dimension_numbers = #tpu.dot_dimension_numbers<[1], [0], [0], [1], [0, 0, 1, 1], [], []>} : vector<16x32xf32>, vector<32x64xf32>, vector<16x64xf32> -> vector<16x64xf32>
    %c384 = arith.constant 384 : index
    %c0_53 = arith.constant 0 : index
    %185 = vector.load %arg1[%c384, %c0_53] : memref<496x128xf32, #tpu.memory_space<vmem>>, vector<1x64xf32>
    %186 = vector.broadcast %185 : vector<1x64xf32> to vector<16x64xf32>
    %187 = arith.addf %184, %186 : vector<16x64xf32>
    %cst_54 = arith.constant 0.000000e+00 : f32
    %188 = vector.broadcast %cst_54 : f32 to vector<16x64xf32>
    %189 = arith.maximumf %187, %188 : vector<16x64xf32>
    %c392 = arith.constant 392 : index
    %c0_55 = arith.constant 0 : index
    %190 = vector.load %arg1[%c392, %c0_55] : memref<496x128xf32, #tpu.memory_space<vmem>>, vector<64x32xf32>
    %cst_56 = arith.constant dense<0.000000e+00> : vector<16x32xf32>
    %191 = tpu.matmul %189, %190, %cst_56 {dimension_numbers = #tpu.dot_dimension_numbers<[1], [0], [0], [1], [0, 0, 1, 1], [], []>} : vector<16x64xf32>, vector<64x32xf32>, vector<16x32xf32> -> vector<16x32xf32>
    %c456 = arith.constant 456 : index
    %c0_57 = arith.constant 0 : index
    %192 = vector.load %arg1[%c456, %c0_57] : memref<496x128xf32, #tpu.memory_space<vmem>>, vector<1x32xf32>
    %193 = vector.broadcast %192 : vector<1x32xf32> to vector<16x32xf32>
    %194 = arith.addf %191, %193 : vector<16x32xf32>
    %195 = arith.addf %182, %194 : vector<16x32xf32>
    %c480 = arith.constant 480 : index
    %c0_58 = arith.constant 0 : index
    %196 = vector.load %arg1[%c480, %c0_58] : memref<496x128xf32, #tpu.memory_space<vmem>>, vector<1x32xf32>
    %c488 = arith.constant 488 : index
    %c0_59 = arith.constant 0 : index
    %197 = vector.load %arg1[%c488, %c0_59] : memref<496x128xf32, #tpu.memory_space<vmem>>, vector<1x32xf32>
    %cst_60 = arith.constant dense<0.000000e+00> : vector<16xf32>
    %198 = vector.multi_reduction <add>, %195, %cst_60 [1] : vector<16x32xf32> to vector<16xf32>
    %199 = vector.shape_cast %198 : vector<16xf32> to vector<16x1xf32>
    %cst_61 = arith.constant 3.200000e+01 : f32
    %200 = vector.broadcast %cst_61 : f32 to vector<16x1xf32>
    %201 = arith.divf %199, %200 : vector<16x1xf32>
    %202 = vector.broadcast %201 : vector<16x1xf32> to vector<16x32xf32>
    %203 = arith.subf %195, %202 : vector<16x32xf32>
    %204 = arith.mulf %203, %203 : vector<16x32xf32>
    %cst_62 = arith.constant dense<0.000000e+00> : vector<16xf32>
    %205 = vector.multi_reduction <add>, %204, %cst_62 [1] : vector<16x32xf32> to vector<16xf32>
    %206 = vector.shape_cast %205 : vector<16xf32> to vector<16x1xf32>
    %cst_63 = arith.constant 3.200000e+01 : f32
    %207 = vector.broadcast %cst_63 : f32 to vector<16x1xf32>
    %208 = arith.divf %206, %207 : vector<16x1xf32>
    %209 = vector.broadcast %201 : vector<16x1xf32> to vector<16x32xf32>
    %210 = arith.subf %195, %209 : vector<16x32xf32>
    %cst_64 = arith.constant 9.99999974E-6 : f32
    %211 = vector.broadcast %cst_64 : f32 to vector<16x1xf32>
    %212 = arith.addf %208, %211 : vector<16x1xf32>
    %213 = math.rsqrt %212 : vector<16x1xf32>
    %214 = vector.broadcast %213 : vector<16x1xf32> to vector<16x32xf32>
    %215 = arith.mulf %210, %214 : vector<16x32xf32>
    %216 = vector.broadcast %196 : vector<1x32xf32> to vector<16x32xf32>
    %217 = arith.mulf %215, %216 : vector<16x32xf32>
    %218 = vector.broadcast %197 : vector<1x32xf32> to vector<16x32xf32>
    %219 = arith.addf %217, %218 : vector<16x32xf32>
    %220 = vector.shape_cast %219 : vector<16x32xf32> to vector<2x8x32xf32>
    %221 = vector.extract_strided_slice %220 {offsets = [0, 7, 0], sizes = [2, 1, 32], strides = [1, 1, 1]} : vector<2x8x32xf32> to vector<2x1x32xf32>
    %222 = vector.shape_cast %221 : vector<2x1x32xf32> to vector<2x32xf32>
    %c8 = arith.constant 8 : index
    %c0_65 = arith.constant 0 : index
    %223 = vector.load %arg1[%c8, %c0_65] : memref<496x128xf32, #tpu.memory_space<vmem>>, vector<32x8xf32>
    %cst_66 = arith.constant dense<0.000000e+00> : vector<2x8xf32>
    %224 = tpu.matmul %222, %223, %cst_66 {dimension_numbers = #tpu.dot_dimension_numbers<[1], [0], [0], [1], [0, 0, 1, 1], [], []>} : vector<2x32xf32>, vector<32x8xf32>, vector<2x8xf32> -> vector<2x8xf32>
    %c40 = arith.constant 40 : index
    %c0_67 = arith.constant 0 : index
    %225 = vector.load %arg1[%c40, %c0_67] : memref<496x128xf32, #tpu.memory_space<vmem>>, vector<1x8xf32>
    %226 = vector.broadcast %225 : vector<1x8xf32> to vector<2x8xf32>
    %227 = arith.addf %224, %226 : vector<2x8xf32>
    %cst_68 = arith.constant dense<0xFF800000> : vector<2xf32>
    %228 = vector.multi_reduction <maximumf>, %227, %cst_68 [1] : vector<2x8xf32> to vector<2xf32>
    %229 = vector.shape_cast %228 : vector<2xf32> to vector<2x1xf32>
    %230 = vector.broadcast %229 : vector<2x1xf32> to vector<2x8xf32>
    %231 = arith.subf %227, %230 : vector<2x8xf32>
    %232 = math.exp %231 : vector<2x8xf32>
    %cst_69 = arith.constant dense<0.000000e+00> : vector<2xf32>
    %233 = vector.multi_reduction <add>, %232, %cst_69 [1] : vector<2x8xf32> to vector<2xf32>
    %234 = vector.shape_cast %233 : vector<2xf32> to vector<2x1xf32>
    %235 = tpu.reciprocal %234 : vector<2x1xf32> -> vector<2x1xf32>
    %236 = vector.broadcast %235 : vector<2x1xf32> to vector<2x8xf32>
    %237 = arith.mulf %232, %236 : vector<2x8xf32>
    %c0_70 = arith.constant 0 : index
    %c0_71 = arith.constant 0 : index
    %238 = vector.load %arg2[%c0_70, %c0_71] : memref<2x8xf32, #tpu.memory_space<vmem>>, vector<2x8xf32>
    tpu.vector_store %arg2[%c0_70, %c0_71], %237 {strides = array<i32>} : memref<2x8xf32, #tpu.memory_space<vmem>>, vector<2x8xf32>,
    return
  }
}

</mosaic_0001>

<llo_original>
// kernel: stock_price_transformer.1
$region0: #{stock_price_transformer.1}
  #allocation0 [shape = 'u32[]', space=smem, size = 0x4, offset = 0x4, fixed_abs, tag = 'smem constant byte address 0x4 - core index']
  #allocation1 [shape = 'u32[144,128]{1,0:T(1,128)}', space=vmem, size = 0x12000, scoped, tag = 'internal scratch']
  %s0 = inlined_call_operand.hbm [shape: f32[2,8,32], index: 0, kind: input, shape index: {}]
  %s1 = inlined_call_operand.hbm [shape: f32[496,128], index: 1, kind: input, shape index: {}]
  %s2 = inlined_call_operand.hbm [shape: f32[2,8], index: 2, kind: output, shape index: {}]
  %s3 = sld [smem:[#allocation0]]
  $region26: #{stock_price_transformer.1} parent=0
    _
  %s5 = ssub.s32 1, %s3
  %s6 = scalar_select 0, %s5, %s3
  $region1: #{stock_price_transformer.1} parent=0
    #allocation2 [shape = 'u8[8192]{0}', space=vmem, size = 0x2000, scoped, tag = 'input window, operand 0, single buffered']
    #allocation3 [shape = 's32[1]{0}', space=sflag, size = 0x4, scoped, tag = 'scoped memory for stock_price_transformer.1']
    #allocation4 [shape = 's32[1]{0}', space=sflag, size = 0x4, scoped, tag = 'scoped memory for stock_price_transformer.1']
    #allocation5 [shape = 'u8[253952]{0}', space=vmem, size = 0x3e000, scoped, tag = 'input window, operand 1, single buffered']
    #allocation6 [shape = 's32[1]{0}', space=sflag, size = 0x4, scoped, tag = 'scoped memory for stock_price_transformer.1']
    #allocation7 [shape = 'u8[1024]{0}', space=vmem, size = 0x400, scoped, tag = 'output window, operand 0, single buffered']
    %7 = vsyncpa [#allocation3], 0
    %8 = vsyncpa [#allocation6], 0
    %9 = vsyncpa [#allocation4], 0
    // Predicated region
    $region2: #{stock_price_transformer.1} parent=1 // pred_check
      _
    $region3: #{stock_price_transformer.1} parent=1 // pred_check_branch
      %11 = sbr.rel (0) target = $region5
    $region4: #{stock_price_transformer.1} parent=1 // pred_region
      %s13 = ssub.s32 256, 256
      %14 = vsyncadd [#allocation3], %s13
      %s15 = sshll.u32 [#allocation2], 4
      %s16 = int_to_ptr.vmem [resolvable:$true] %s15
      %21 = dma.hbm_to_vmem [thread:$0]  %s0, 256, %s16, [#allocation3], 128, 128, 8
    $region5: #{stock_price_transformer.1} parent=1 // pred_fallthru
      _
    // Predicated region
    $region6: #{stock_price_transformer.1} parent=1 // pred_check
      _
    $region7: #{stock_price_transformer.1} parent=1 // pred_check_branch
      %23 = sbr.rel (0) target = $region9
    $region8: #{stock_price_transformer.1} parent=1 // pred_region
      %s25 = ssub.s32 7936, 7936
      %26 = vsyncadd [#allocation6], %s25
      %s27 = sshll.u32 [#allocation5], 4
      %s28 = int_to_ptr.vmem [resolvable:$true] %s27
      %33 = dma.hbm_to_vmem [thread:$0]  %s1, 7936, %s28, [#allocation6], 128, 128, 8
    $region9: #{stock_price_transformer.1} parent=1 // pred_fallthru
      _
    // Predicated region
    $region10: #{stock_price_transformer.1} parent=1 // pred_check
      _
    $region11: #{stock_price_transformer.1} parent=1 // pred_check_branch
      %35 = sbr.rel (0) target = $region13
    $region12: #{stock_price_transformer.1} parent=1 // pred_region
      %36 = dma.done [#allocation3], 256
    $region13: #{stock_price_transformer.1} parent=1 // pred_fallthru
      _
    // Predicated region
    $region14: #{stock_price_transformer.1} parent=1 // pred_check
      _
    $region15: #{stock_price_transformer.1} parent=1 // pred_check_branch
      %38 = sbr.rel (0) target = $region17
    $region16: #{stock_price_transformer.1} parent=1 // pred_region
      %39 = dma.done [#allocation6], 7936
    $region17: #{stock_price_transformer.1} parent=1 // pred_fallthru
      _
    %v40 = vld [vmem:[#allocation5] sm:$0x3]
    %v41 = vld [vmem:[#allocation2] sm:$0xff]
    %v42 = vld [vmem:[#allocation2 + $0x8] sm:$0xff]
    %v45 = vunpack.c.l.s4 1966171168
    %v46 = vunpack.c.0.s8 %v45
    %v47 = vlaneseq
    %v48 = vshrl.u32 %v47, 7
    %v49 = vsub.s32 %v46, %v48
    %v50 = vrot.slane %v40, %v49
    %v51 = vcombine.high %v50, %v50
    %v53 = vunpack.c.l.s4 1966171168
    %v54 = vunpack.c.0.s8 %v53
    %v55 = vlaneseq
    %v56 = vshrl.u32 %v55, 7
    %v57 = vsub.s32 %v54, %v56
    %v58 = vrot.slane %v50, %v57
    %v60 = vunpack.c.l.s4 1966171168
    %v61 = vunpack.c.0.s8 %v60
    %v62 = vlaneseq
    %v63 = vshrl.u32 %v62, 7
    %v64 = vsub.s32 %v61, %v63
    %v65 = vrot.slane %v51, %v64
    %v66 = vlaneseq
    %v67 = vshrl.u32 %v66, 7
    %v68 = vsub.s32 0, %v67
    %v69 = vrot.slane %v58, %v68
    %v70 = vlaneseq
    %v71 = vshrl.u32 %v70, 7
    %v72 = vsub.s32 0, %v71
    %v73 = vrot.slane %v65, %v72
    %v76 = vadd.f32 %v41, %v69
    %v77 = vadd.f32 %v42, %v73
    %v78 = vld [vmem:[#allocation5 + $0x30] sm:$0xff]
    %v79 = vld [vmem:[#allocation5 + $0x38] sm:$0xff]
    %v80 = vld [vmem:[#allocation5 + $0x40] sm:$0xff]
    %v81 = vld [vmem:[#allocation5 + $0x48] sm:$0xff]
    %v82 = vld [vmem:[#allocation5 + $0x50] sm:$0x1]
    %v83 = vlaneseq
    %v84 = vshrl.u32 %v83, 7
    %v85 = vsub.s32 0, %v84
    %v86 = vrot.slane %v82, %v85
    %vm87 = vcmask 261120
    %v89 = vsel %vm87, %v76, 0
    %v92 = vsel %vm87, %v77, 0
    %94 = vmatprep.subr.mxu0 0.0
    %95 = vmatpush1.msra.mxu0 %v78
    %96 = vmatprep.subr.mxu0 0.0
    %97 = vmatpush1.msra.mxu0 %v79
    %98 = vmatprep.subr.mxu0 0.0
    %99 = vmatpush1.msra.mxu0 %v80
    %100 = vmatprep.subr.mxu0 0.0
    %101 = vmatpush1.msra.mxu0 %v81
    %102 = vmatprep.subr.mxu0 0.0
    %103 = vmatpush1.msra.mxu0 0.0
    %104 = vmatprep.subr.mxu0 0.0
    %105 = vmatpush1.msra.mxu0 0.0
    %106 = vmatprep.subr.mxu0 0.0
    %107 = vmatpush1.msra.mxu0 0.0
    %108 = vmatprep.subr.mxu0 0.0
    %109 = vmatpush1.msra.mxu0 0.0
    %110 = vmatprep.subr.mxu0 0.0
    %111 = vmatpush1.msra.mxu0 0.0
    %112 = vmatprep.subr.mxu0 0.0
    %113 = vmatpush1.msra.mxu0 0.0
    %114 = vmatprep.subr.mxu0 0.0
    %115 = vmatpush1.msra.mxu0 0.0
    %116 = vmatprep.subr.mxu0 0.0
    %117 = vmatpush1.msra.mxu0 0.0
    %118 = vmatprep.subr.mxu0 0.0
    %119 = vmatpush1.msra.mxu0 0.0
    %120 = vmatprep.subr.mxu0 0.0
    %121 = vmatpush1.msra.mxu0 0.0
    %122 = vmatprep.subr.mxu0 0.0
    %123 = vmatpush1.msra.mxu0 0.0
    %124 = vmatprep.subr.mxu0 0.0
    %125 = vmatpush1.msra.mxu0 0.0
    %126 = vmatprep.subr.mxu0 0.0
    %127 = vmatpush1.msra.mxu0 0.0
    %128 = vmatprep.subr.mxu0 0.0
    %129 = vmatpush1.msra.mxu0 0.0
    %130 = vmatprep.subr.mxu0 0.0
    %131 = vmatpush1.msra.mxu0 0.0
    %132 = vmatprep.subr.mxu0 0.0
    %133 = vmatpush1.msra.mxu0 0.0
    %134 = vmatprep.subr.mxu0 0.0
    %135 = vmatpush1.msra.mxu0 0.0
    %136 = vmatprep.subr.mxu0 0.0
    %137 = vmatpush1.msra.mxu0 0.0
    %138 = vmatprep.subr.mxu0 0.0
    %139 = vmatpush1.msra.mxu0 0.0
    %140 = vmatprep.subr.mxu0 0.0
    %141 = vmatpush1.msra.mxu0 0.0
    %142 = vmatprep.subr.mxu0 0.0
    %143 = vmatpush1.msra.mxu0 0.0
    %144 = vmatprep.subr.mxu0 0.0
    %145 = vmatpush1.msra.mxu0 0.0
    %146 = vmatprep.subr.mxu0 0.0
    %147 = vmatpush1.msra.mxu0 0.0
    %148 = vmatprep.subr.mxu0 0.0
    %149 = vmatpush1.msra.mxu0 0.0
    %150 = vmatprep.subr.mxu0 0.0
    %151 = vmatpush1.msra.mxu0 0.0
    %152 = vmatprep.subr.mxu0 0.0
    %153 = vmatpush1.msra.mxu0 0.0
    %154 = vmatprep.subr.mxu0 0.0
    %155 = vmatpush1.msra.mxu0 0.0
    %156 = vmatprep.subr.mxu0 0.0
    %157 = vmatpush1.msra.mxu0 0.0
    %158 = vmatprep.mubr.f32.mxu0 0.0
    %159 = vmatmul.mubr.f32.gmra.mrb[0].mxu0 %v89
    %v160 = vpop.f32.mrb[0].mxu0
    %v161 = vadd.f32 %v86, %v160
    %v162 = vpop.f32.mrb[0].mxu0
    %163 = vmatprep.mubr.f32.mxu0 0.0
    %164 = vmatmul.mubr.f32.gmra.mrb[0].mxu0 %v92
    %v165 = vpop.f32.mrb[0].mxu0
    %v166 = vadd.f32 %v86, %v165
    %v167 = vpop.f32.mrb[0].mxu0
    %168 = vdwg.mxu0
    %171 = vrot.lane.b32.xlu0 %v161, 112
    %v172 = vpop.permute.xlu0 %171
    %173 = vrot.lane.b32.xlu0 %v166, 112
    %v174 = vpop.permute.xlu0 %173
    %175 = vrot.lane.b32.xlu0 %v161, 96
    %v176 = vpop.permute.xlu0 %175
    %vm177 = vcmask 130048
    %v178 = vsel %vm177, %v161, 0
    %v180 = vsel %vm177, %v176, 0
    %182 = vmatprep.subr.mxu0 0.0
    %183 = vmatpush1.xpose.msra.mxu0 %v180
    %184 = vmatprep.subr.mxu0 0.0
    %185 = vmatpush1.xpose.msra.mxu0 0.0
    %186 = vmatprep.subr.mxu0 0.0
    %187 = vmatpush1.xpose.msra.mxu0 0.0
    %188 = vmatprep.subr.mxu0 0.0
    %189 = vmatpush1.xpose.msra.mxu0 0.0
    %190 = vmatprep.subr.mxu0 0.0
    %191 = vmatpush1.xpose.msra.mxu0 0.0
    %192 = vmatprep.subr.mxu0 0.0
    %193 = vmatpush1.xpose.msra.mxu0 0.0
    %194 = vmatprep.subr.mxu0 0.0
    %195 = vmatpush1.xpose.msra.mxu0 0.0
    %196 = vmatprep.subr.mxu0 0.0
    %197 = vmatpush1.xpose.msra.mxu0 0.0
    %198 = vmatprep.subr.mxu0 0.0
    %199 = vmatpush1.xpose.msra.mxu0 0.0
    %200 = vmatprep.subr.mxu0 0.0
    %201 = vmatpush1.xpose.msra.mxu0 0.0
    %202 = vmatprep.subr.mxu0 0.0
    %203 = vmatpush1.xpose.msra.mxu0 0.0
    %204 = vmatprep.subr.mxu0 0.0
    %205 = vmatpush1.xpose.msra.mxu0 0.0
    %206 = vmatprep.subr.mxu0 0.0
    %207 = vmatpush1.xpose.msra.mxu0 0.0
    %208 = vmatprep.subr.mxu0 0.0
    %209 = vmatpush1.xpose.msra.mxu0 0.0
    %210 = vmatprep.subr.mxu0 0.0
    %211 = vmatpush1.xpose.msra.mxu0 0.0
    %212 = vmatprep.subr.mxu0 0.0
    %213 = vmatpush1.xpose.msra.mxu0 0.0
    %214 = vmatprep.subr.mxu0 0.0
    %215 = vmatpush1.xpose.msra.mxu0 0.0
    %216 = vmatprep.subr.mxu0 0.0
    %217 = vmatpush1.xpose.msra.mxu0 0.0
    %218 = vmatprep.subr.mxu0 0.0
    %219 = vmatpush1.xpose.msra.mxu0 0.0
    %220 = vmatprep.subr.mxu0 0.0
    %221 = vmatpush1.xpose.msra.mxu0 0.0
    %222 = vmatprep.subr.mxu0 0.0
    %223 = vmatpush1.xpose.msra.mxu0 0.0
    %224 = vmatprep.subr.mxu0 0.0
    %225 = vmatpush1.xpose.msra.mxu0 0.0
    %226 = vmatprep.subr.mxu0 0.0
    %227 = vmatpush1.xpose.msra.mxu0 0.0
    %228 = vmatprep.subr.mxu0 0.0
    %229 = vmatpush1.xpose.msra.mxu0 0.0
    %230 = vmatprep.subr.mxu0 0.0
    %231 = vmatpush1.xpose.msra.mxu0 0.0
    %232 = vmatprep.subr.mxu0 0.0
    %233 = vmatpush1.xpose.msra.mxu0 0.0
    %234 = vmatprep.subr.mxu0 0.0
    %235 = vmatpush1.xpose.msra.mxu0 0.0
    %236 = vmatprep.subr.mxu0 0.0
    %237 = vmatpush1.xpose.msra.mxu0 0.0
    %238 = vmatprep.subr.mxu0 0.0
    %239 = vmatpush1.xpose.msra.mxu0 0.0
    %240 = vmatprep.subr.mxu0 0.0
    %241 = vmatpush1.xpose.msra.mxu0 0.0
    %242 = vmatprep.subr.mxu0 0.0
    %243 = vmatpush1.xpose.msra.mxu0 0.0
    %244 = vmatprep.subr.mxu0 0.0
    %245 = vmatpush1.xpose.msra.mxu0 0.0
    %246 = vmatprep.mubr.f32.mxu0 0.0
    %247 = vmatmul.mubr.f32.gmra.mrb[0].mxu0 %v178
    %v248 = vpop.f32.mrb[0].mxu0
    %v249 = vadd.f32 0.0, %v248
    %v250 = vpop.f32.mrb[0].mxu0
    %251 = vdwg.mxu0
    %252 = vrot.lane.b32.xlu0 %v166, 96
    %v253 = vpop.permute.xlu0 %252
    %v254 = vsel %vm177, %v166, 0
    %v256 = vsel %vm177, %v253, 0
    %258 = vmatprep.subr.mxu0 0.0
    %259 = vmatpush1.xpose.msra.mxu0 %v256
    %260 = vmatprep.subr.mxu0 0.0
    %261 = vmatpush1.xpose.msra.mxu0 0.0
    %262 = vmatprep.subr.mxu0 0.0
    %263 = vmatpush1.xpose.msra.mxu0 0.0
    %264 = vmatprep.subr.mxu0 0.0
    %265 = vmatpush1.xpose.msra.mxu0 0.0
    %266 = vmatprep.subr.mxu0 0.0
    %267 = vmatpush1.xpose.msra.mxu0 0.0
    %268 = vmatprep.subr.mxu0 0.0
    %269 = vmatpush1.xpose.msra.mxu0 0.0
    %270 = vmatprep.subr.mxu0 0.0
    %271 = vmatpush1.xpose.msra.mxu0 0.0
    %272 = vmatprep.subr.mxu0 0.0
    %273 = vmatpush1.xpose.msra.mxu0 0.0
    %274 = vmatprep.subr.mxu0 0.0
    %275 = vmatpush1.xpose.msra.mxu0 0.0
    %276 = vmatprep.subr.mxu0 0.0
    %277 = vmatpush1.xpose.msra.mxu0 0.0
    %278 = vmatprep.subr.mxu0 0.0
    %279 = vmatpush1.xpose.msra.mxu0 0.0
    %280 = vmatprep.subr.mxu0 0.0
    %281 = vmatpush1.xpose.msra.mxu0 0.0
    %282 = vmatprep.subr.mxu0 0.0
    %283 = vmatpush1.xpose.msra.mxu0 0.0
    %284 = vmatprep.subr.mxu0 0.0
    %285 = vmatpush1.xpose.msra.mxu0 0.0
    %286 = vmatprep.subr.mxu0 0.0
    %287 = vmatpush1.xpose.msra.mxu0 0.0
    %288 = vmatprep.subr.mxu0 0.0
    %289 = vmatpush1.xpose.msra.mxu0 0.0
    %290 = vmatprep.subr.mxu0 0.0
    %291 = vmatpush1.xpose.msra.mxu0 0.0
    %292 = vmatprep.subr.mxu0 0.0
    %293 = vmatpush1.xpose.msra.mxu0 0.0
    %294 = vmatprep.subr.mxu0 0.0
    %295 = vmatpush1.xpose.msra.mxu0 0.0
    %296 = vmatprep.subr.mxu0 0.0
    %297 = vmatpush1.xpose.msra.mxu0 0.0
    %298 = vmatprep.subr.mxu0 0.0
    %299 = vmatpush1.xpose.msra.mxu0 0.0
    %300 = vmatprep.subr.mxu0 0.0
    %301 = vmatpush1.xpose.msra.mxu0 0.0
    %302 = vmatprep.subr.mxu0 0.0
    %303 = vmatpush1.xpose.msra.mxu0 0.0
    %304 = vmatprep.subr.mxu0 0.0
    %305 = vmatpush1.xpose.msra.mxu0 0.0
    %306 = vmatprep.subr.mxu0 0.0
    %307 = vmatpush1.xpose.msra.mxu0 0.0
    %308 = vmatprep.subr.mxu0 0.0
    %309 = vmatpush1.xpose.msra.mxu0 0.0
    %310 = vmatprep.subr.mxu0 0.0
    %311 = vmatpush1.xpose.msra.mxu0 0.0
    %312 = vmatprep.subr.mxu0 0.0
    %313 = vmatpush1.xpose.msra.mxu0 0.0
    %314 = vmatprep.subr.mxu0 0.0
    %315 = vmatpush1.xpose.msra.mxu0 0.0
    %316 = vmatprep.subr.mxu0 0.0
    %317 = vmatpush1.xpose.msra.mxu0 0.0
    %318 = vmatprep.subr.mxu0 0.0
    %319 = vmatpush1.xpose.msra.mxu0 0.0
    %320 = vmatprep.subr.mxu0 0.0
    %321 = vmatpush1.xpose.msra.mxu0 0.0
    %322 = vmatprep.mubr.f32.mxu0 0.0
    %323 = vmatmul.mubr.f32.gmra.mrb[0].mxu0 %v254
    %v324 = vpop.f32.mrb[0].mxu0
    %v325 = vadd.f32 0.0, %v324
    %v326 = vpop.f32.mrb[0].mxu0
    %327 = vdwg.mxu0
    %328 = vrot.lane.b32.xlu0 %v172, 96
    %v329 = vpop.permute.xlu0 %328
    %v330 = vsel %vm177, %v172, 0
    %v332 = vsel %vm177, %v329, 0
    %334 = vmatprep.subr.mxu0 0.0
    %335 = vmatpush1.xpose.msra.mxu0 %v332
    %336 = vmatprep.subr.mxu0 0.0
    %337 = vmatpush1.xpose.msra.mxu0 0.0
    %338 = vmatprep.subr.mxu0 0.0
    %339 = vmatpush1.xpose.msra.mxu0 0.0
    %340 = vmatprep.subr.mxu0 0.0
    %341 = vmatpush1.xpose.msra.mxu0 0.0
    %342 = vmatprep.subr.mxu0 0.0
    %343 = vmatpush1.xpose.msra.mxu0 0.0
    %344 = vmatprep.subr.mxu0 0.0
    %345 = vmatpush1.xpose.msra.mxu0 0.0
    %346 = vmatprep.subr.mxu0 0.0
    %347 = vmatpush1.xpose.msra.mxu0 0.0
    %348 = vmatprep.subr.mxu0 0.0
    %349 = vmatpush1.xpose.msra.mxu0 0.0
    %350 = vmatprep.subr.mxu0 0.0
    %351 = vmatpush1.xpose.msra.mxu0 0.0
    %352 = vmatprep.subr.mxu0 0.0
    %353 = vmatpush1.xpose.msra.mxu0 0.0
    %354 = vmatprep.subr.mxu0 0.0
    %355 = vmatpush1.xpose.msra.mxu0 0.0
    %356 = vmatprep.subr.mxu0 0.0
    %357 = vmatpush1.xpose.msra.mxu0 0.0
    %358 = vmatprep.subr.mxu0 0.0
    %359 = vmatpush1.xpose.msra.mxu0 0.0
    %360 = vmatprep.subr.mxu0 0.0
    %361 = vmatpush1.xpose.msra.mxu0 0.0
    %362 = vmatprep.subr.mxu0 0.0
    %363 = vmatpush1.xpose.msra.mxu0 0.0
    %364 = vmatprep.subr.mxu0 0.0
    %365 = vmatpush1.xpose.msra.mxu0 0.0
    %366 = vmatprep.subr.mxu0 0.0
    %367 = vmatpush1.xpose.msra.mxu0 0.0
    %368 = vmatprep.subr.mxu0 0.0
    %369 = vmatpush1.xpose.msra.mxu0 0.0
    %370 = vmatprep.subr.mxu0 0.0
    %371 = vmatpush1.xpose.msra.mxu0 0.0
    %372 = vmatprep.subr.mxu0 0.0
    %373 = vmatpush1.xpose.msra.mxu0 0.0
    %374 = vmatprep.subr.mxu0 0.0
    %375 = vmatpush1.xpose.msra.mxu0 0.0
    %376 = vmatprep.subr.mxu0 0.0
    %377 = vmatpush1.xpose.msra.mxu0 0.0
    %378 = vmatprep.subr.mxu0 0.0
    %379 = vmatpush1.xpose.msra.mxu0 0.0
    %380 = vmatprep.subr.mxu0 0.0
    %381 = vmatpush1.xpose.msra.mxu0 0.0
    %382 = vmatprep.subr.mxu0 0.0
    %383 = vmatpush1.xpose.msra.mxu0 0.0
    %384 = vmatprep.subr.mxu0 0.0
    %385 = vmatpush1.xpose.msra.mxu0 0.0
    %386 = vmatprep.subr.mxu0 0.0
    %387 = vmatpush1.xpose.msra.mxu0 0.0
    %388 = vmatprep.subr.mxu0 0.0
    %389 = vmatpush1.xpose.msra.mxu0 0.0
    %390 = vmatprep.subr.mxu0 0.0
    %391 = vmatpush1.xpose.msra.mxu0 0.0
    %392 = vmatprep.subr.mxu0 0.0
    %393 = vmatpush1.xpose.msra.mxu0 0.0
    %394 = vmatprep.subr.mxu0 0.0
    %395 = vmatpush1.xpose.msra.mxu0 0.0
    %396 = vmatprep.subr.mxu0 0.0
    %397 = vmatpush1.xpose.msra.mxu0 0.0
    %398 = vmatprep.mubr.f32.mxu0 0.0
    %399 = vmatmul.mubr.f32.gmra.mrb[0].mxu0 %v330
    %v400 = vpop.f32.mrb[0].mxu0
    %v401 = vadd.f32 0.0, %v400
    %v402 = vpop.f32.mrb[0].mxu0
    %403 = vdwg.mxu0
    %404 = vrot.lane.b32.xlu0 %v174, 96
    %v405 = vpop.permute.xlu0 %404
    %v406 = vsel %vm177, %v174, 0
    %v408 = vsel %vm177, %v405, 0
    %410 = vmatprep.subr.mxu0 0.0
    %411 = vmatpush1.xpose.msra.mxu0 %v408
    %412 = vmatprep.subr.mxu0 0.0
    %413 = vmatpush1.xpose.msra.mxu0 0.0
    %414 = vmatprep.subr.mxu0 0.0
    %415 = vmatpush1.xpose.msra.mxu0 0.0
    %416 = vmatprep.subr.mxu0 0.0
    %417 = vmatpush1.xpose.msra.mxu0 0.0
    %418 = vmatprep.subr.mxu0 0.0
    %419 = vmatpush1.xpose.msra.mxu0 0.0
    %420 = vmatprep.subr.mxu0 0.0
    %421 = vmatpush1.xpose.msra.mxu0 0.0
    %422 = vmatprep.subr.mxu0 0.0
    %423 = vmatpush1.xpose.msra.mxu0 0.0
    %424 = vmatprep.subr.mxu0 0.0
    %425 = vmatpush1.xpose.msra.mxu0 0.0
    %426 = vmatprep.subr.mxu0 0.0
    %427 = vmatpush1.xpose.msra.mxu0 0.0
    %428 = vmatprep.subr.mxu0 0.0
    %429 = vmatpush1.xpose.msra.mxu0 0.0
    %430 = vmatprep.subr.mxu0 0.0
    %431 = vmatpush1.xpose.msra.mxu0 0.0
    %432 = vmatprep.subr.mxu0 0.0
    %433 = vmatpush1.xpose.msra.mxu0 0.0
    %434 = vmatprep.subr.mxu0 0.0
    %435 = vmatpush1.xpose.msra.mxu0 0.0
    %436 = vmatprep.subr.mxu0 0.0
    %437 = vmatpush1.xpose.msra.mxu0 0.0
    %438 = vmatprep.subr.mxu0 0.0
    %439 = vmatpush1.xpose.msra.mxu0 0.0
    %440 = vmatprep.subr.mxu0 0.0
    %441 = vmatpush1.xpose.msra.mxu0 0.0
    %442 = vmatprep.subr.mxu0 0.0
    %443 = vmatpush1.xpose.msra.mxu0 0.0
    %444 = vmatprep.subr.mxu0 0.0
    %445 = vmatpush1.xpose.msra.mxu0 0.0
    %446 = vmatprep.subr.mxu0 0.0
    %447 = vmatpush1.xpose.msra.mxu0 0.0
    %448 = vmatprep.subr.mxu0 0.0
    %449 = vmatpush1.xpose.msra.mxu0 0.0
    %450 = vmatprep.subr.mxu0 0.0
    %451 = vmatpush1.xpose.msra.mxu0 0.0
    %452 = vmatprep.subr.mxu0 0.0
    %453 = vmatpush1.xpose.msra.mxu0 0.0
    %454 = vmatprep.subr.mxu0 0.0
    %455 = vmatpush1.xpose.msra.mxu0 0.0
    %456 = vmatprep.subr.mxu0 0.0
    %457 = vmatpush1.xpose.msra.mxu0 0.0
    %458 = vmatprep.subr.mxu0 0.0
    %459 = vmatpush1.xpose.msra.mxu0 0.0
    %460 = vmatprep.subr.mxu0 0.0
    %461 = vmatpush1.xpose.msra.mxu0 0.0
    %462 = vmatprep.subr.mxu0 0.0
    %463 = vmatpush1.xpose.msra.mxu0 0.0
    %464 = vmatprep.subr.mxu0 0.0
    %465 = vmatpush1.xpose.msra.mxu0 0.0
    %466 = vmatprep.subr.mxu0 0.0
    %467 = vmatpush1.xpose.msra.mxu0 0.0
    %468 = vmatprep.subr.mxu0 0.0
    %469 = vmatpush1.xpose.msra.mxu0 0.0
    %470 = vmatprep.subr.mxu0 0.0
    %471 = vmatpush1.xpose.msra.mxu0 0.0
    %472 = vmatprep.subr.mxu0 0.0
    %473 = vmatpush1.xpose.msra.mxu0 0.0
    %474 = vmatprep.mubr.f32.mxu0 0.0
    %475 = vmatmul.mubr.f32.gmra.mrb[0].mxu0 %v406
    %v476 = vpop.f32.mrb[0].mxu0
    %v477 = vadd.f32 0.0, %v476
    %v478 = vpop.f32.mrb[0].mxu0
    %479 = vdwg.mxu0
    %vm480 = vcmask 64512
    %v481 = vsel %vm480, %v249, -inf
    %482 = vmax.xlane.f32.xlu0 %v481
    %v483 = vpop.xlane.xlu0 %482
    %v484 = vsel %vm480, %v325, -inf
    %485 = vmax.xlane.f32.xlu0 %v484
    %v486 = vpop.xlane.xlu0 %485
    %v487 = vsel %vm480, %v401, -inf
    %488 = vmax.xlane.f32.xlu0 %v487
    %v489 = vpop.xlane.xlu0 %488
    %v490 = vsel %vm480, %v477, -inf
    %491 = vmax.xlane.f32.xlu0 %v490
    %v492 = vpop.xlane.xlu0 %491
    %v493 = vsub.f32 %v249, %v483
    %v494 = vsub.f32 %v325, %v486
    %v495 = vsub.f32 %v401, %v489
    %v496 = vsub.f32 %v477, %v492
    %v497 = vmul.f32 %v493, 1.442695
    %v498 = vpow.pop %v497
    %v499 = vmul.f32 %v494, 1.442695
    %v500 = vpow.pop %v499
    %v501 = vmul.f32 %v495, 1.442695
    %v502 = vpow.pop %v501
    %v503 = vmul.f32 %v496, 1.442695
    %v504 = vpow.pop %v503
    %v505 = vsel %vm480, %v498, 0.0
    %506 = vadd.xlane.f32.xlu0 %v505
    %v507 = vpop.xlane.xlu0 %506
    %v508 = vsel %vm480, %v500, 0.0
    %509 = vadd.xlane.f32.xlu0 %v508
    %v510 = vpop.xlane.xlu0 %509
    %v511 = vsel %vm480, %v502, 0.0
    %512 = vadd.xlane.f32.xlu0 %v511
    %v513 = vpop.xlane.xlu0 %512
    %v514 = vsel %vm480, %v504, 0.0
    %515 = vadd.xlane.f32.xlu0 %v514
    %v516 = vpop.xlane.xlu0 %515
    %v517 = vrcp.pop %v507
    %v518 = vrcp.pop %v510
    %v519 = vrcp.pop %v513
    %v520 = vrcp.pop %v516
    %v521 = vmul.f32 %v498, %v517
    %v522 = vmul.f32 %v500, %v518
    %v523 = vmul.f32 %v502, %v519
    %v524 = vmul.f32 %v504, %v520
    %525 = vrot.lane.b32.xlu0 %v161, 64
    %v526 = vpop.permute.xlu0 %525
    %v529 = vsel %vm480, %v521, 0
    %531 = vmatprep.subr.mxu0 0.0
    %532 = vmatpush1.msra.mxu0 %v526
    %533 = vmatprep.subr.mxu0 0.0
    %534 = vmatpush1.msra.mxu0 0.0
    %535 = vmatprep.subr.mxu0 0.0
    %536 = vmatpush1.msra.mxu0 0.0
    %537 = vmatprep.subr.mxu0 0.0
    %538 = vmatpush1.msra.mxu0 0.0
    %539 = vmatprep.subr.mxu0 0.0
    %540 = vmatpush1.msra.mxu0 0.0
    %541 = vmatprep.subr.mxu0 0.0
    %542 = vmatpush1.msra.mxu0 0.0
    %543 = vmatprep.subr.mxu0 0.0
    %544 = vmatpush1.msra.mxu0 0.0
    %545 = vmatprep.subr.mxu0 0.0
    %546 = vmatpush1.msra.mxu0 0.0
    %547 = vmatprep.subr.mxu0 0.0
    %548 = vmatpush1.msra.mxu0 0.0
    %549 = vmatprep.subr.mxu0 0.0
    %550 = vmatpush1.msra.mxu0 0.0
    %551 = vmatprep.subr.mxu0 0.0
    %552 = vmatpush1.msra.mxu0 0.0
    %553 = vmatprep.subr.mxu0 0.0
    %554 = vmatpush1.msra.mxu0 0.0
    %555 = vmatprep.subr.mxu0 0.0
    %556 = vmatpush1.msra.mxu0 0.0
    %557 = vmatprep.subr.mxu0 0.0
    %558 = vmatpush1.msra.mxu0 0.0
    %559 = vmatprep.subr.mxu0 0.0
    %560 = vmatpush1.msra.mxu0 0.0
    %561 = vmatprep.subr.mxu0 0.0
    %562 = vmatpush1.msra.mxu0 0.0
    %563 = vmatprep.subr.mxu0 0.0
    %564 = vmatpush1.msra.mxu0 0.0
    %565 = vmatprep.subr.mxu0 0.0
    %566 = vmatpush1.msra.mxu0 0.0
    %567 = vmatprep.subr.mxu0 0.0
    %568 = vmatpush1.msra.mxu0 0.0
    %569 = vmatprep.subr.mxu0 0.0
    %570 = vmatpush1.msra.mxu0 0.0
    %571 = vmatprep.subr.mxu0 0.0
    %572 = vmatpush1.msra.mxu0 0.0
    %573 = vmatprep.subr.mxu0 0.0
    %574 = vmatpush1.msra.mxu0 0.0
    %575 = vmatprep.subr.mxu0 0.0
    %576 = vmatpush1.msra.mxu0 0.0
    %577 = vmatprep.subr.mxu0 0.0
    %578 = vmatpush1.msra.mxu0 0.0
    %579 = vmatprep.subr.mxu0 0.0
    %580 = vmatpush1.msra.mxu0 0.0
    %581 = vmatprep.subr.mxu0 0.0
    %582 = vmatpush1.msra.mxu0 0.0
    %583 = vmatprep.subr.mxu0 0.0
    %584 = vmatpush1.msra.mxu0 0.0
    %585 = vmatprep.subr.mxu0 0.0
    %586 = vmatpush1.msra.mxu0 0.0
    %587 = vmatprep.subr.mxu0 0.0
    %588 = vmatpush1.msra.mxu0 0.0
    %589 = vmatprep.subr.mxu0 0.0
    %590 = vmatpush1.msra.mxu0 0.0
    %591 = vmatprep.subr.mxu0 0.0
    %592 = vmatpush1.msra.mxu0 0.0
    %593 = vmatprep.subr.mxu0 0.0
    %594 = vmatpush1.msra.mxu0 0.0
    %595 = vmatprep.mubr.f32.mxu0 0.0
    %596 = vmatmul.mubr.f32.gmra.mrb[0].mxu0 %v529
    %v597 = vpop.f32.mrb[0].mxu0
    %v598 = vadd.f32 0.0, %v597
    %v599 = vpop.f32.mrb[0].mxu0
    %600 = vdwg.mxu0
    %601 = vrot.lane.b32.xlu0 %v166, 64
    %v602 = vpop.permute.xlu0 %601
    %v605 = vsel %vm480, %v522, 0
    %607 = vmatprep.subr.mxu0 0.0
    %608 = vmatpush1.msra.mxu0 %v602
    %609 = vmatprep.subr.mxu0 0.0
    %610 = vmatpush1.msra.mxu0 0.0
    %611 = vmatprep.subr.mxu0 0.0
    %612 = vmatpush1.msra.mxu0 0.0
    %613 = vmatprep.subr.mxu0 0.0
    %614 = vmatpush1.msra.mxu0 0.0
    %615 = vmatprep.subr.mxu0 0.0
    %616 = vmatpush1.msra.mxu0 0.0
    %617 = vmatprep.subr.mxu0 0.0
    %618 = vmatpush1.msra.mxu0 0.0
    %619 = vmatprep.subr.mxu0 0.0
    %620 = vmatpush1.msra.mxu0 0.0
    %621 = vmatprep.subr.mxu0 0.0
    %622 = vmatpush1.msra.mxu0 0.0
    %623 = vmatprep.subr.mxu0 0.0
    %624 = vmatpush1.msra.mxu0 0.0
    %625 = vmatprep.subr.mxu0 0.0
    %626 = vmatpush1.msra.mxu0 0.0
    %627 = vmatprep.subr.mxu0 0.0
    %628 = vmatpush1.msra.mxu0 0.0
    %629 = vmatprep.subr.mxu0 0.0
    %630 = vmatpush1.msra.mxu0 0.0
    %631 = vmatprep.subr.mxu0 0.0
    %632 = vmatpush1.msra.mxu0 0.0
    %633 = vmatprep.subr.mxu0 0.0
    %634 = vmatpush1.msra.mxu0 0.0
    %635 = vmatprep.subr.mxu0 0.0
    %636 = vmatpush1.msra.mxu0 0.0
    %637 = vmatprep.subr.mxu0 0.0
    %638 = vmatpush1.msra.mxu0 0.0
    %639 = vmatprep.subr.mxu0 0.0
    %640 = vmatpush1.msra.mxu0 0.0
    %641 = vmatprep.subr.mxu0 0.0
    %642 = vmatpush1.msra.mxu0 0.0
    %643 = vmatprep.subr.mxu0 0.0
    %644 = vmatpush1.msra.mxu0 0.0
    %645 = vmatprep.subr.mxu0 0.0
    %646 = vmatpush1.msra.mxu0 0.0
    %647 = vmatprep.subr.mxu0 0.0
    %648 = vmatpush1.msra.mxu0 0.0
    %649 = vmatprep.subr.mxu0 0.0
    %650 = vmatpush1.msra.mxu0 0.0
    %651 = vmatprep.subr.mxu0 0.0
    %652 = vmatpush1.msra.mxu0 0.0
    %653 = vmatprep.subr.mxu0 0.0
    %654 = vmatpush1.msra.mxu0 0.0
    %655 = vmatprep.subr.mxu0 0.0
    %656 = vmatpush1.msra.mxu0 0.0
    %657 = vmatprep.subr.mxu0 0.0
    %658 = vmatpush1.msra.mxu0 0.0
    %659 = vmatprep.subr.mxu0 0.0
    %660 = vmatpush1.msra.mxu0 0.0
    %661 = vmatprep.subr.mxu0 0.0
    %662 = vmatpush1.msra.mxu0 0.0
    %663 = vmatprep.subr.mxu0 0.0
    %664 = vmatpush1.msra.mxu0 0.0
    %665 = vmatprep.subr.mxu0 0.0
    %666 = vmatpush1.msra.mxu0 0.0
    %667 = vmatprep.subr.mxu0 0.0
    %668 = vmatpush1.msra.mxu0 0.0
    %669 = vmatprep.subr.mxu0 0.0
    %670 = vmatpush1.msra.mxu0 0.0
    %671 = vmatprep.mubr.f32.mxu0 0.0
    %672 = vmatmul.mubr.f32.gmra.mrb[0].mxu0 %v605
    %v673 = vpop.f32.mrb[0].mxu0
    %v674 = vadd.f32 0.0, %v673
    %v675 = vpop.f32.mrb[0].mxu0
    %676 = vdwg.mxu0
    %677 = vrot.lane.b32.xlu0 %v172, 64
    %v678 = vpop.permute.xlu0 %677
    %v681 = vsel %vm480, %v523, 0
    %683 = vmatprep.subr.mxu0 0.0
    %684 = vmatpush1.msra.mxu0 %v678
    %685 = vmatprep.subr.mxu0 0.0
    %686 = vmatpush1.msra.mxu0 0.0
    %687 = vmatprep.subr.mxu0 0.0
    %688 = vmatpush1.msra.mxu0 0.0
    %689 = vmatprep.subr.mxu0 0.0
    %690 = vmatpush1.msra.mxu0 0.0
    %691 = vmatprep.subr.mxu0 0.0
    %692 = vmatpush1.msra.mxu0 0.0
    %693 = vmatprep.subr.mxu0 0.0
    %694 = vmatpush1.msra.mxu0 0.0
    %695 = vmatprep.subr.mxu0 0.0
    %696 = vmatpush1.msra.mxu0 0.0
    %697 = vmatprep.subr.mxu0 0.0
    %698 = vmatpush1.msra.mxu0 0.0
    %699 = vmatprep.subr.mxu0 0.0
    %700 = vmatpush1.msra.mxu0 0.0
    %701 = vmatprep.subr.mxu0 0.0
    %702 = vmatpush1.msra.mxu0 0.0
    %703 = vmatprep.subr.mxu0 0.0
    %704 = vmatpush1.msra.mxu0 0.0
    %705 = vmatprep.subr.mxu0 0.0
    %706 = vmatpush1.msra.mxu0 0.0
    %707 = vmatprep.subr.mxu0 0.0
    %708 = vmatpush1.msra.mxu0 0.0
    %709 = vmatprep.subr.mxu0 0.0
    %710 = vmatpush1.msra.mxu0 0.0
    %711 = vmatprep.subr.mxu0 0.0
    %712 = vmatpush1.msra.mxu0 0.0
    %713 = vmatprep.subr.mxu0 0.0
    %714 = vmatpush1.msra.mxu0 0.0
    %715 = vmatprep.subr.mxu0 0.0
    %716 = vmatpush1.msra.mxu0 0.0
    %717 = vmatprep.subr.mxu0 0.0
    %718 = vmatpush1.msra.mxu0 0.0
    %719 = vmatprep.subr.mxu0 0.0
    %720 = vmatpush1.msra.mxu0 0.0
    %721 = vmatprep.subr.mxu0 0.0
    %722 = vmatpush1.msra.mxu0 0.0
    %723 = vmatprep.subr.mxu0 0.0
    %724 = vmatpush1.msra.mxu0 0.0
    %725 = vmatprep.subr.mxu0 0.0
    %726 = vmatpush1.msra.mxu0 0.0
    %727 = vmatprep.subr.mxu0 0.0
    %728 = vmatpush1.msra.mxu0 0.0
    %729 = vmatprep.subr.mxu0 0.0
    %730 = vmatpush1.msra.mxu0 0.0
    %731 = vmatprep.subr.mxu0 0.0
    %732 = vmatpush1.msra.mxu0 0.0
    %733 = vmatprep.subr.mxu0 0.0
    %734 = vmatpush1.msra.mxu0 0.0
    %735 = vmatprep.subr.mxu0 0.0
    %736 = vmatpush1.msra.mxu0 0.0
    %737 = vmatprep.subr.mxu0 0.0
    %738 = vmatpush1.msra.mxu0 0.0
    %739 = vmatprep.subr.mxu0 0.0
    %740 = vmatpush1.msra.mxu0 0.0
    %741 = vmatprep.subr.mxu0 0.0
    %742 = vmatpush1.msra.mxu0 0.0
    %743 = vmatprep.subr.mxu0 0.0
    %744 = vmatpush1.msra.mxu0 0.0
    %745 = vmatprep.subr.mxu0 0.0
    %746 = vmatpush1.msra.mxu0 0.0
    %747 = vmatprep.mubr.f32.mxu0 0.0
    %748 = vmatmul.mubr.f32.gmra.mrb[0].mxu0 %v681
    %v749 = vpop.f32.mrb[0].mxu0
    %v750 = vadd.f32 0.0, %v749
    %v751 = vpop.f32.mrb[0].mxu0
    %752 = vdwg.mxu0
    %753 = vrot.lane.b32.xlu0 %v174, 64
    %v754 = vpop.permute.xlu0 %753
    %v757 = vsel %vm480, %v524, 0
    %759 = vmatprep.subr.mxu0 0.0
    %760 = vmatpush1.msra.mxu0 %v754
    %761 = vmatprep.subr.mxu0 0.0
    %762 = vmatpush1.msra.mxu0 0.0
    %763 = vmatprep.subr.mxu0 0.0
    %764 = vmatpush1.msra.mxu0 0.0
    %765 = vmatprep.subr.mxu0 0.0
    %766 = vmatpush1.msra.mxu0 0.0
    %767 = vmatprep.subr.mxu0 0.0
    %768 = vmatpush1.msra.mxu0 0.0
    %769 = vmatprep.subr.mxu0 0.0
    %770 = vmatpush1.msra.mxu0 0.0
    %771 = vmatprep.subr.mxu0 0.0
    %772 = vmatpush1.msra.mxu0 0.0
    %773 = vmatprep.subr.mxu0 0.0
    %774 = vmatpush1.msra.mxu0 0.0
    %775 = vmatprep.subr.mxu0 0.0
    %776 = vmatpush1.msra.mxu0 0.0
    %777 = vmatprep.subr.mxu0 0.0
    %778 = vmatpush1.msra.mxu0 0.0
    %779 = vmatprep.subr.mxu0 0.0
    %780 = vmatpush1.msra.mxu0 0.0
    %781 = vmatprep.subr.mxu0 0.0
    %782 = vmatpush1.msra.mxu0 0.0
    %783 = vmatprep.subr.mxu0 0.0
    %784 = vmatpush1.msra.mxu0 0.0
    %785 = vmatprep.subr.mxu0 0.0
    %786 = vmatpush1.msra.mxu0 0.0
    %787 = vmatprep.subr.mxu0 0.0
    %788 = vmatpush1.msra.mxu0 0.0
    %789 = vmatprep.subr.mxu0 0.0
    %790 = vmatpush1.msra.mxu0 0.0
    %791 = vmatprep.subr.mxu0 0.0
    %792 = vmatpush1.msra.mxu0 0.0
    %793 = vmatprep.subr.mxu0 0.0
    %794 = vmatpush1.msra.mxu0 0.0
    %795 = vmatprep.subr.mxu0 0.0
    %796 = vmatpush1.msra.mxu0 0.0
    %797 = vmatprep.subr.mxu0 0.0
    %798 = vmatpush1.msra.mxu0 0.0
    %799 = vmatprep.subr.mxu0 0.0
    %800 = vmatpush1.msra.mxu0 0.0
    %801 = vmatprep.subr.mxu0 0.0
    %802 = vmatpush1.msra.mxu0 0.0
    %803 = vmatprep.subr.mxu0 0.0
    %804 = vmatpush1.msra.mxu0 0.0
    %805 = vmatprep.subr.mxu0 0.0
    %806 = vmatpush1.msra.mxu0 0.0
    %807 = vmatprep.subr.mxu0 0.0
    %808 = vmatpush1.msra.mxu0 0.0
    %809 = vmatprep.subr.mxu0 0.0
    %810 = vmatpush1.msra.mxu0 0.0
    %811 = vmatprep.subr.mxu0 0.0
    %812 = vmatpush1.msra.mxu0 0.0
    %813 = vmatprep.subr.mxu0 0.0
    %814 = vmatpush1.msra.mxu0 0.0
    %815 = vmatprep.subr.mxu0 0.0
    %816 = vmatpush1.msra.mxu0 0.0
    %817 = vmatprep.subr.mxu0 0.0
    %818 = vmatpush1.msra.mxu0 0.0
    %819 = vmatprep.subr.mxu0 0.0
    %820 = vmatpush1.msra.mxu0 0.0
    %821 = vmatprep.subr.mxu0 0.0
    %822 = vmatpush1.msra.mxu0 0.0
    %823 = vmatprep.mubr.f32.mxu0 0.0
    %824 = vmatmul.mubr.f32.gmra.mrb[0].mxu0 %v757
    %v825 = vpop.f32.mrb[0].mxu0
    %v826 = vadd.f32 0.0, %v825
    %v827 = vpop.f32.mrb[0].mxu0
    %828 = vdwg.mxu0
    %831 = vrot.lane.b32.xlu0 %v750, 16
    %v832 = vpop.permute.xlu0 %831
    %833 = vrot.lane.b32.xlu0 %v826, 16
    %v834 = vpop.permute.xlu0 %833
    %v837 = vsel %vm177, %v598, %v832
    %v838 = vsel %vm177, %v674, %v834
    %v839 = vld [vmem:[#allocation5 + $0x58] sm:$0xff]
    %v840 = vld [vmem:[#allocation5 + $0x60] sm:$0xff]
    %v841 = vld [vmem:[#allocation5 + $0x68] sm:$0xff]
    %v842 = vld [vmem:[#allocation5 + $0x70] sm:$0xff]
    %v843 = vld [vmem:[#allocation5 + $0x78] sm:$0x1]
    %v844 = vlaneseq
    %v845 = vshrl.u32 %v844, 7
    %v846 = vsub.s32 0, %v845
    %v847 = vrot.slane %v843, %v846
    %v849 = vsel %vm87, %v837, 0
    %v852 = vsel %vm87, %v838, 0
    %854 = vmatprep.subr.mxu0 0.0
    %855 = vmatpush1.msra.mxu0 %v839
    %856 = vmatprep.subr.mxu0 0.0
    %857 = vmatpush1.msra.mxu0 %v840
    %858 = vmatprep.subr.mxu0 0.0
    %859 = vmatpush1.msra.mxu0 %v841
    %860 = vmatprep.subr.mxu0 0.0
    %861 = vmatpush1.msra.mxu0 %v842
    %862 = vmatprep.subr.mxu0 0.0
    %863 = vmatpush1.msra.mxu0 0.0
    %864 = vmatprep.subr.mxu0 0.0
    %865 = vmatpush1.msra.mxu0 0.0
    %866 = vmatprep.subr.mxu0 0.0
    %867 = vmatpush1.msra.mxu0 0.0
    %868 = vmatprep.subr.mxu0 0.0
    %869 = vmatpush1.msra.mxu0 0.0
    %870 = vmatprep.subr.mxu0 0.0
    %871 = vmatpush1.msra.mxu0 0.0
    %872 = vmatprep.subr.mxu0 0.0
    %873 = vmatpush1.msra.mxu0 0.0
    %874 = vmatprep.subr.mxu0 0.0
    %875 = vmatpush1.msra.mxu0 0.0
    %876 = vmatprep.subr.mxu0 0.0
    %877 = vmatpush1.msra.mxu0 0.0
    %878 = vmatprep.subr.mxu0 0.0
    %879 = vmatpush1.msra.mxu0 0.0
    %880 = vmatprep.subr.mxu0 0.0
    %881 = vmatpush1.msra.mxu0 0.0
    %882 = vmatprep.subr.mxu0 0.0
    %883 = vmatpush1.msra.mxu0 0.0
    %884 = vmatprep.subr.mxu0 0.0
    %885 = vmatpush1.msra.mxu0 0.0
    %886 = vmatprep.subr.mxu0 0.0
    %887 = vmatpush1.msra.mxu0 0.0
    %888 = vmatprep.subr.mxu0 0.0
    %889 = vmatpush1.msra.mxu0 0.0
    %890 = vmatprep.subr.mxu0 0.0
    %891 = vmatpush1.msra.mxu0 0.0
    %892 = vmatprep.subr.mxu0 0.0
    %893 = vmatpush1.msra.mxu0 0.0
    %894 = vmatprep.subr.mxu0 0.0
    %895 = vmatpush1.msra.mxu0 0.0
    %896 = vmatprep.subr.mxu0 0.0
    %897 = vmatpush1.msra.mxu0 0.0
    %898 = vmatprep.subr.mxu0 0.0
    %899 = vmatpush1.msra.mxu0 0.0
    %900 = vmatprep.subr.mxu0 0.0
    %901 = vmatpush1.msra.mxu0 0.0
    %902 = vmatprep.subr.mxu0 0.0
    %903 = vmatpush1.msra.mxu0 0.0
    %904 = vmatprep.subr.mxu0 0.0
    %905 = vmatpush1.msra.mxu0 0.0
    %906 = vmatprep.subr.mxu0 0.0
    %907 = vmatpush1.msra.mxu0 0.0
    %908 = vmatprep.subr.mxu0 0.0
    %909 = vmatpush1.msra.mxu0 0.0
    %910 = vmatprep.subr.mxu0 0.0
    %911 = vmatpush1.msra.mxu0 0.0
    %912 = vmatprep.subr.mxu0 0.0
    %913 = vmatpush1.msra.mxu0 0.0
    %914 = vmatprep.subr.mxu0 0.0
    %915 = vmatpush1.msra.mxu0 0.0
    %916 = vmatprep.subr.mxu0 0.0
    %917 = vmatpush1.msra.mxu0 0.0
    %918 = vmatprep.mubr.f32.mxu0 0.0
    %919 = vmatmul.mubr.f32.gmra.mrb[0].mxu0 %v849
    %v920 = vpop.f32.mrb[0].mxu0
    %v921 = vadd.f32 %v847, %v920
    %v922 = vpop.f32.mrb[0].mxu0
    %923 = vmatprep.mubr.f32.mxu0 0.0
    %924 = vmatmul.mubr.f32.gmra.mrb[0].mxu0 %v852
    %v925 = vpop.f32.mrb[0].mxu0
    %v926 = vadd.f32 %v847, %v925
    %v927 = vpop.f32.mrb[0].mxu0
    %928 = vdwg.mxu0
    %v929 = vadd.f32 %v76, %v921
    %v930 = vadd.f32 %v77, %v926
    %v931 = vld [vmem:[#allocation5 + $0xf0] sm:$0x1]
    %v932 = vld [vmem:[#allocation5 + $0xf8] sm:$0x1]
    %v933 = vsel %vm87, %v929, 0.0
    %934 = vadd.xlane.f32.xlu0 %v933
    %v935 = vpop.xlane.xlu0 %934
    %v936 = vsel %vm87, %v930, 0.0
    %937 = vadd.xlane.f32.xlu0 %v936
    %v938 = vpop.xlane.xlu0 %937
    %v939 = vrcp.pop 32.0
    %v940 = vmul.f32 %v935, %v939
    %v941 = vmul.f32 %v938, %v939
    %v942 = vsub.f32 %v929, %v940
    %v943 = vsub.f32 %v930, %v941
    %v944 = vmul.f32 %v942, %v942
    %v945 = vmul.f32 %v943, %v943
    %v946 = vsel %vm87, %v944, 0.0
    %947 = vadd.xlane.f32.xlu0 %v946
    %v948 = vpop.xlane.xlu0 %947
    %v949 = vsel %vm87, %v945, 0.0
    %950 = vadd.xlane.f32.xlu0 %v949
    %v951 = vpop.xlane.xlu0 %950
    %v952 = vmul.f32 %v948, %v939
    %v953 = vmul.f32 %v951, %v939
    %v954 = vadd.f32 %v952, 1e-05
    %v955 = vadd.f32 %v953, 1e-05
    %v956 = vrsqrt.pop %v954
    %v957 = vrsqrt.pop %v955
    %v958 = vmul.f32 %v942, %v956
    %v959 = vmul.f32 %v943, %v957
    %v960 = vlaneseq
    %v961 = vshrl.u32 %v960, 7
    %v962 = vsub.s32 0, %v961
    %v963 = vrot.slane %v931, %v962
    %v964 = vmul.f32 %v958, %v963
    %v965 = vmul.f32 %v959, %v963
    %v966 = vlaneseq
    %v967 = vshrl.u32 %v966, 7
    %v968 = vsub.s32 0, %v967
    %v969 = vrot.slane %v932, %v968
    %v970 = vadd.f32 %v964, %v969
    %v971 = vadd.f32 %v965, %v969
    %v972 = vld [vmem:[#allocation5 + $0x80] sm:$0xff]
    %v973 = vld [vmem:[#allocation5 + $0x88] sm:$0xff]
    %v974 = vld [vmem:[#allocation5 + $0x90] sm:$0xff]
    %v975 = vld [vmem:[#allocation5 + $0x98] sm:$0xff]
    %v976 = vld [vmem:[#allocation5 + $0xa0] sm:$0x1]
    %v977 = vlaneseq
    %v978 = vshrl.u32 %v977, 7
    %v979 = vsub.s32 0, %v978
    %v980 = vrot.slane %v976, %v979
    %v982 = vsel %vm87, %v970, 0
    %v985 = vsel %vm87, %v971, 0
    %987 = vmatprep.subr.mxu0 0.0
    %988 = vmatpush1.msra.mxu0 %v972
    %989 = vmatprep.subr.mxu0 0.0
    %990 = vmatpush1.msra.mxu0 %v973
    %991 = vmatprep.subr.mxu0 0.0
    %992 = vmatpush1.msra.mxu0 %v974
    %993 = vmatprep.subr.mxu0 0.0
    %994 = vmatpush1.msra.mxu0 %v975
    %995 = vmatprep.subr.mxu0 0.0
    %996 = vmatpush1.msra.mxu0 0.0
    %997 = vmatprep.subr.mxu0 0.0
    %998 = vmatpush1.msra.mxu0 0.0
    %999 = vmatprep.subr.mxu0 0.0
    %1000 = vmatpush1.msra.mxu0 0.0
    %1001 = vmatprep.subr.mxu0 0.0
    %1002 = vmatpush1.msra.mxu0 0.0
    %1003 = vmatprep.subr.mxu0 0.0
    %1004 = vmatpush1.msra.mxu0 0.0
    %1005 = vmatprep.subr.mxu0 0.0
    %1006 = vmatpush1.msra.mxu0 0.0
    %1007 = vmatprep.subr.mxu0 0.0
    %1008 = vmatpush1.msra.mxu0 0.0
    %1009 = vmatprep.subr.mxu0 0.0
    %1010 = vmatpush1.msra.mxu0 0.0
    %1011 = vmatprep.subr.mxu0 0.0
    %1012 = vmatpush1.msra.mxu0 0.0
    %1013 = vmatprep.subr.mxu0 0.0
    %1014 = vmatpush1.msra.mxu0 0.0
    %1015 = vmatprep.subr.mxu0 0.0
    %1016 = vmatpush1.msra.mxu0 0.0
    %1017 = vmatprep.subr.mxu0 0.0
    %1018 = vmatpush1.msra.mxu0 0.0
    %1019 = vmatprep.subr.mxu0 0.0
    %1020 = vmatpush1.msra.mxu0 0.0
    %1021 = vmatprep.subr.mxu0 0.0
    %1022 = vmatpush1.msra.mxu0 0.0
    %1023 = vmatprep.subr.mxu0 0.0
    %1024 = vmatpush1.msra.mxu0 0.0
    %1025 = vmatprep.subr.mxu0 0.0
    %1026 = vmatpush1.msra.mxu0 0.0
    %1027 = vmatprep.subr.mxu0 0.0
    %1028 = vmatpush1.msra.mxu0 0.0
    %1029 = vmatprep.subr.mxu0 0.0
    %1030 = vmatpush1.msra.mxu0 0.0
    %1031 = vmatprep.subr.mxu0 0.0
    %1032 = vmatpush1.msra.mxu0 0.0
    %1033 = vmatprep.subr.mxu0 0.0
    %1034 = vmatpush1.msra.mxu0 0.0
    %1035 = vmatprep.subr.mxu0 0.0
    %1036 = vmatpush1.msra.mxu0 0.0
    %1037 = vmatprep.subr.mxu0 0.0
    %1038 = vmatpush1.msra.mxu0 0.0
    %1039 = vmatprep.subr.mxu0 0.0
    %1040 = vmatpush1.msra.mxu0 0.0
    %1041 = vmatprep.subr.mxu0 0.0
    %1042 = vmatpush1.msra.mxu0 0.0
    %1043 = vmatprep.subr.mxu0 0.0
    %1044 = vmatpush1.msra.mxu0 0.0
    %1045 = vmatprep.subr.mxu0 0.0
    %1046 = vmatpush1.msra.mxu0 0.0
    %1047 = vmatprep.subr.mxu0 0.0
    %1048 = vmatpush1.msra.mxu0 0.0
    %1049 = vmatprep.subr.mxu0 0.0
    %1050 = vmatpush1.msra.mxu0 0.0
    %1051 = vmatprep.mubr.f32.mxu0 0.0
    %1052 = vmatmul.mubr.f32.gmra.mrb[0].mxu0 %v982
    %v1053 = vpop.f32.mrb[0].mxu0
    %v1054 = vadd.f32 %v980, %v1053
    %v1055 = vpop.f32.mrb[0].mxu0
    %1056 = vmatprep.mubr.f32.mxu0 0.0
    %1057 = vmatmul.mubr.f32.gmra.mrb[0].mxu0 %v985
    %v1058 = vpop.f32.mrb[0].mxu0
    %v1059 = vadd.f32 %v980, %v1058
    %v1060 = vpop.f32.mrb[0].mxu0
    %1061 = vdwg.mxu0
    %v1062 = vmax.f32 %v1054, 0.0
    %v1063 = vmax.f32 %v1059, 0.0
    %v1064 = vld [vmem:[#allocation5 + $0xa8] sm:$0xff]
    %v1065 = vld [vmem:[#allocation5 + $0xb0] sm:$0xff]
    %v1066 = vld [vmem:[#allocation5 + $0xb8] sm:$0xff]
    %v1067 = vld [vmem:[#allocation5 + $0xc0] sm:$0xff]
    %v1068 = vld [vmem:[#allocation5 + $0xc8] sm:$0xff]
    %v1069 = vld [vmem:[#allocation5 + $0xd0] sm:$0xff]
    %v1070 = vld [vmem:[#allocation5 + $0xd8] sm:$0xff]
    %v1071 = vld [vmem:[#allocation5 + $0xe0] sm:$0xff]
    %v1072 = vld [vmem:[#allocation5 + $0xe8] sm:$0x1]
    %v1073 = vlaneseq
    %v1074 = vshrl.u32 %v1073, 7
    %v1075 = vsub.s32 0, %v1074
    %v1076 = vrot.slane %v1072, %v1075
    %vm1077 = vcmask 523264
    %v1079 = vsel %vm1077, %v1062, 0
    %v1082 = vsel %vm1077, %v1063, 0
    %1084 = vmatprep.subr.mxu0 0.0
    %1085 = vmatpush1.msra.mxu0 %v1064
    %1086 = vmatprep.subr.mxu0 0.0
    %1087 = vmatpush1.msra.mxu0 %v1065
    %1088 = vmatprep.subr.mxu0 0.0
    %1089 = vmatpush1.msra.mxu0 %v1066
    %1090 = vmatprep.subr.mxu0 0.0
    %1091 = vmatpush1.msra.mxu0 %v1067
    %1092 = vmatprep.subr.mxu0 0.0
    %1093 = vmatpush1.msra.mxu0 %v1068
    %1094 = vmatprep.subr.mxu0 0.0
    %1095 = vmatpush1.msra.mxu0 %v1069
    %1096 = vmatprep.subr.mxu0 0.0
    %1097 = vmatpush1.msra.mxu0 %v1070
    %1098 = vmatprep.subr.mxu0 0.0
    %1099 = vmatpush1.msra.mxu0 %v1071
    %1100 = vmatprep.subr.mxu0 0.0
    %1101 = vmatpush1.msra.mxu0 0.0
    %1102 = vmatprep.subr.mxu0 0.0
    %1103 = vmatpush1.msra.mxu0 0.0
    %1104 = vmatprep.subr.mxu0 0.0
    %1105 = vmatpush1.msra.mxu0 0.0
    %1106 = vmatprep.subr.mxu0 0.0
    %1107 = vmatpush1.msra.mxu0 0.0
    %1108 = vmatprep.subr.mxu0 0.0
    %1109 = vmatpush1.msra.mxu0 0.0
    %1110 = vmatprep.subr.mxu0 0.0
    %1111 = vmatpush1.msra.mxu0 0.0
    %1112 = vmatprep.subr.mxu0 0.0
    %1113 = vmatpush1.msra.mxu0 0.0
    %1114 = vmatprep.subr.mxu0 0.0
    %1115 = vmatpush1.msra.mxu0 0.0
    %1116 = vmatprep.subr.mxu0 0.0
    %1117 = vmatpush1.msra.mxu0 0.0
    %1118 = vmatprep.subr.mxu0 0.0
    %1119 = vmatpush1.msra.mxu0 0.0
    %1120 = vmatprep.subr.mxu0 0.0
    %1121 = vmatpush1.msra.mxu0 0.0
    %1122 = vmatprep.subr.mxu0 0.0
    %1123 = vmatpush1.msra.mxu0 0.0
    %1124 = vmatprep.subr.mxu0 0.0
    %1125 = vmatpush1.msra.mxu0 0.0
    %1126 = vmatprep.subr.mxu0 0.0
    %1127 = vmatpush1.msra.mxu0 0.0
    %1128 = vmatprep.subr.mxu0 0.0
    %1129 = vmatpush1.msra.mxu0 0.0
    %1130 = vmatprep.subr.mxu0 0.0
    %1131 = vmatpush1.msra.mxu0 0.0
    %1132 = vmatprep.subr.mxu0 0.0
    %1133 = vmatpush1.msra.mxu0 0.0
    %1134 = vmatprep.subr.mxu0 0.0
    %1135 = vmatpush1.msra.mxu0 0.0
    %1136 = vmatprep.subr.mxu0 0.0
    %1137 = vmatpush1.msra.mxu0 0.0
    %1138 = vmatprep.subr.mxu0 0.0
    %1139 = vmatpush1.msra.mxu0 0.0
    %1140 = vmatprep.subr.mxu0 0.0
    %1141 = vmatpush1.msra.mxu0 0.0
    %1142 = vmatprep.subr.mxu0 0.0
    %1143 = vmatpush1.msra.mxu0 0.0
    %1144 = vmatprep.subr.mxu0 0.0
    %1145 = vmatpush1.msra.mxu0 0.0
    %1146 = vmatprep.subr.mxu0 0.0
    %1147 = vmatpush1.msra.mxu0 0.0
    %1148 = vmatprep.mubr.f32.mxu0 0.0
    %1149 = vmatmul.mubr.f32.gmra.mrb[0].mxu0 %v1079
    %v1150 = vpop.f32.mrb[0].mxu0
    %v1151 = vadd.f32 %v1076, %v1150
    %v1152 = vpop.f32.mrb[0].mxu0
    %1153 = vmatprep.mubr.f32.mxu0 0.0
    %1154 = vmatmul.mubr.f32.gmra.mrb[0].mxu0 %v1082
    %v1155 = vpop.f32.mrb[0].mxu0
    %v1156 = vadd.f32 %v1076, %v1155
    %v1157 = vpop.f32.mrb[0].mxu0
    %1158 = vdwg.mxu0
    %v1159 = vadd.f32 %v970, %v1151
    %v1160 = vadd.f32 %v971, %v1156
    %v1161 = vld [vmem:[#allocation5 + $0x100] sm:$0x1]
    %v1162 = vld [vmem:[#allocation5 + $0x108] sm:$0x1]
    %v1163 = vsel %vm87, %v1159, 0.0
    %1164 = vadd.xlane.f32.xlu0 %v1163
    %v1165 = vpop.xlane.xlu0 %1164
    %v1166 = vsel %vm87, %v1160, 0.0
    %1167 = vadd.xlane.f32.xlu0 %v1166
    %v1168 = vpop.xlane.xlu0 %1167
    %v1169 = vmul.f32 %v1165, %v939
    %v1170 = vmul.f32 %v1168, %v939
    %v1171 = vsub.f32 %v1159, %v1169
    %v1172 = vsub.f32 %v1160, %v1170
    %v1173 = vmul.f32 %v1171, %v1171
    %v1174 = vmul.f32 %v1172, %v1172
    %v1175 = vsel %vm87, %v1173, 0.0
    %1176 = vadd.xlane.f32.xlu0 %v1175
    %v1177 = vpop.xlane.xlu0 %1176
    %v1178 = vsel %vm87, %v1174, 0.0
    %1179 = vadd.xlane.f32.xlu0 %v1178
    %v1180 = vpop.xlane.xlu0 %1179
    %v1181 = vmul.f32 %v1177, %v939
    %v1182 = vmul.f32 %v1180, %v939
    %v1183 = vadd.f32 %v1181, 1e-05
    %v1184 = vadd.f32 %v1182, 1e-05
    %v1185 = vrsqrt.pop %v1183
    %v1186 = vrsqrt.pop %v1184
    %v1187 = vmul.f32 %v1171, %v1185
    %v1188 = vmul.f32 %v1172, %v1186
    %v1189 = vlaneseq
    %v1190 = vshrl.u32 %v1189, 7
    %v1191 = vsub.s32 0, %v1190
    %v1192 = vrot.slane %v1161, %v1191
    %v1193 = vmul.f32 %v1187, %v1192
    %v1194 = vmul.f32 %v1188, %v1192
    %v1195 = vlaneseq
    %v1196 = vshrl.u32 %v1195, 7
    %v1197 = vsub.s32 0, %v1196
    %v1198 = vrot.slane %v1162, %v1197
    %v1199 = vadd.f32 %v1193, %v1198
    %v1200 = vadd.f32 %v1194, %v1198
    %v1201 = vld [vmem:[#allocation5 + $0x110] sm:$0xff]
    %v1202 = vld [vmem:[#allocation5 + $0x118] sm:$0xff]
    %v1203 = vld [vmem:[#allocation5 + $0x120] sm:$0xff]
    %v1204 = vld [vmem:[#allocation5 + $0x128] sm:$0xff]
    %v1205 = vld [vmem:[#allocation5 + $0x130] sm:$0x1]
    %v1206 = vlaneseq
    %v1207 = vshrl.u32 %v1206, 7
    %v1208 = vsub.s32 0, %v1207
    %v1209 = vrot.slane %v1205, %v1208
    %v1211 = vsel %vm87, %v1199, 0
    %v1214 = vsel %vm87, %v1200, 0
    %1216 = vmatprep.subr.mxu0 0.0
    %1217 = vmatpush1.msra.mxu0 %v1201
    %1218 = vmatprep.subr.mxu0 0.0
    %1219 = vmatpush1.msra.mxu0 %v1202
    %1220 = vmatprep.subr.mxu0 0.0
    %1221 = vmatpush1.msra.mxu0 %v1203
    %1222 = vmatprep.subr.mxu0 0.0
    %1223 = vmatpush1.msra.mxu0 %v1204
    %1224 = vmatprep.subr.mxu0 0.0
    %1225 = vmatpush1.msra.mxu0 0.0
    %1226 = vmatprep.subr.mxu0 0.0
    %1227 = vmatpush1.msra.mxu0 0.0
    %1228 = vmatprep.subr.mxu0 0.0
    %1229 = vmatpush1.msra.mxu0 0.0
    %1230 = vmatprep.subr.mxu0 0.0
    %1231 = vmatpush1.msra.mxu0 0.0
    %1232 = vmatprep.subr.mxu0 0.0
    %1233 = vmatpush1.msra.mxu0 0.0
    %1234 = vmatprep.subr.mxu0 0.0
    %1235 = vmatpush1.msra.mxu0 0.0
    %1236 = vmatprep.subr.mxu0 0.0
    %1237 = vmatpush1.msra.mxu0 0.0
    %1238 = vmatprep.subr.mxu0 0.0
    %1239 = vmatpush1.msra.mxu0 0.0
    %1240 = vmatprep.subr.mxu0 0.0
    %1241 = vmatpush1.msra.mxu0 0.0
    %1242 = vmatprep.subr.mxu0 0.0
    %1243 = vmatpush1.msra.mxu0 0.0
    %1244 = vmatprep.subr.mxu0 0.0
    %1245 = vmatpush1.msra.mxu0 0.0
    %1246 = vmatprep.subr.mxu0 0.0
    %1247 = vmatpush1.msra.mxu0 0.0
    %1248 = vmatprep.subr.mxu0 0.0
    %1249 = vmatpush1.msra.mxu0 0.0
    %1250 = vmatprep.subr.mxu0 0.0
    %1251 = vmatpush1.msra.mxu0 0.0
    %1252 = vmatprep.subr.mxu0 0.0
    %1253 = vmatpush1.msra.mxu0 0.0
    %1254 = vmatprep.subr.mxu0 0.0
    %1255 = vmatpush1.msra.mxu0 0.0
    %1256 = vmatprep.subr.mxu0 0.0
    %1257 = vmatpush1.msra.mxu0 0.0
    %1258 = vmatprep.subr.mxu0 0.0
    %1259 = vmatpush1.msra.mxu0 0.0
    %1260 = vmatprep.subr.mxu0 0.0
    %1261 = vmatpush1.msra.mxu0 0.0
    %1262 = vmatprep.subr.mxu0 0.0
    %1263 = vmatpush1.msra.mxu0 0.0
    %1264 = vmatprep.subr.mxu0 0.0
    %1265 = vmatpush1.msra.mxu0 0.0
    %1266 = vmatprep.subr.mxu0 0.0
    %1267 = vmatpush1.msra.mxu0 0.0
    %1268 = vmatprep.subr.mxu0 0.0
    %1269 = vmatpush1.msra.mxu0 0.0
    %1270 = vmatprep.subr.mxu0 0.0
    %1271 = vmatpush1.msra.mxu0 0.0
    %1272 = vmatprep.subr.mxu0 0.0
    %1273 = vmatpush1.msra.mxu0 0.0
    %1274 = vmatprep.subr.mxu0 0.0
    %1275 = vmatpush1.msra.mxu0 0.0
    %1276 = vmatprep.subr.mxu0 0.0
    %1277 = vmatpush1.msra.mxu0 0.0
    %1278 = vmatprep.subr.mxu0 0.0
    %1279 = vmatpush1.msra.mxu0 0.0
    %1280 = vmatprep.mubr.f32.mxu0 0.0
    %1281 = vmatmul.mubr.f32.gmra.mrb[0].mxu0 %v1211
    %v1282 = vpop.f32.mrb[0].mxu0
    %v1283 = vadd.f32 %v1209, %v1282
    %v1284 = vpop.f32.mrb[0].mxu0
    %1285 = vmatprep.mubr.f32.mxu0 0.0
    %1286 = vmatmul.mubr.f32.gmra.mrb[0].mxu0 %v1214
    %v1287 = vpop.f32.mrb[0].mxu0
    %v1288 = vadd.f32 %v1209, %v1287
    %v1289 = vpop.f32.mrb[0].mxu0
    %1290 = vdwg.mxu0
    %1293 = vrot.lane.b32.xlu0 %v1283, 112
    %v1294 = vpop.permute.xlu0 %1293
    %1295 = vrot.lane.b32.xlu0 %v1288, 112
    %v1296 = vpop.permute.xlu0 %1295
    %1297 = vrot.lane.b32.xlu0 %v1283, 96
    %v1298 = vpop.permute.xlu0 %1297
    %v1299 = vsel %vm177, %v1283, 0
    %v1301 = vsel %vm177, %v1298, 0
    %1303 = vmatprep.subr.mxu0 0.0
    %1304 = vmatpush1.xpose.msra.mxu0 %v1301
    %1305 = vmatprep.subr.mxu0 0.0
    %1306 = vmatpush1.xpose.msra.mxu0 0.0
    %1307 = vmatprep.subr.mxu0 0.0
    %1308 = vmatpush1.xpose.msra.mxu0 0.0
    %1309 = vmatprep.subr.mxu0 0.0
    %1310 = vmatpush1.xpose.msra.mxu0 0.0
    %1311 = vmatprep.subr.mxu0 0.0
    %1312 = vmatpush1.xpose.msra.mxu0 0.0
    %1313 = vmatprep.subr.mxu0 0.0
    %1314 = vmatpush1.xpose.msra.mxu0 0.0
    %1315 = vmatprep.subr.mxu0 0.0
    %1316 = vmatpush1.xpose.msra.mxu0 0.0
    %1317 = vmatprep.subr.mxu0 0.0
    %1318 = vmatpush1.xpose.msra.mxu0 0.0
    %1319 = vmatprep.subr.mxu0 0.0
    %1320 = vmatpush1.xpose.msra.mxu0 0.0
    %1321 = vmatprep.subr.mxu0 0.0
    %1322 = vmatpush1.xpose.msra.mxu0 0.0
    %1323 = vmatprep.subr.mxu0 0.0
    %1324 = vmatpush1.xpose.msra.mxu0 0.0
    %1325 = vmatprep.subr.mxu0 0.0
    %1326 = vmatpush1.xpose.msra.mxu0 0.0
    %1327 = vmatprep.subr.mxu0 0.0
    %1328 = vmatpush1.xpose.msra.mxu0 0.0
    %1329 = vmatprep.subr.mxu0 0.0
    %1330 = vmatpush1.xpose.msra.mxu0 0.0
    %1331 = vmatprep.subr.mxu0 0.0
    %1332 = vmatpush1.xpose.msra.mxu0 0.0
    %1333 = vmatprep.subr.mxu0 0.0
    %1334 = vmatpush1.xpose.msra.mxu0 0.0
    %1335 = vmatprep.subr.mxu0 0.0
    %1336 = vmatpush1.xpose.msra.mxu0 0.0
    %1337 = vmatprep.subr.mxu0 0.0
    %1338 = vmatpush1.xpose.msra.mxu0 0.0
    %1339 = vmatprep.subr.mxu0 0.0
    %1340 = vmatpush1.xpose.msra.mxu0 0.0
    %1341 = vmatprep.subr.mxu0 0.0
    %1342 = vmatpush1.xpose.msra.mxu0 0.0
    %1343 = vmatprep.subr.mxu0 0.0
    %1344 = vmatpush1.xpose.msra.mxu0 0.0
    %1345 = vmatprep.subr.mxu0 0.0
    %1346 = vmatpush1.xpose.msra.mxu0 0.0
    %1347 = vmatprep.subr.mxu0 0.0
    %1348 = vmatpush1.xpose.msra.mxu0 0.0
    %1349 = vmatprep.subr.mxu0 0.0
    %1350 = vmatpush1.xpose.msra.mxu0 0.0
    %1351 = vmatprep.subr.mxu0 0.0
    %1352 = vmatpush1.xpose.msra.mxu0 0.0
    %1353 = vmatprep.subr.mxu0 0.0
    %1354 = vmatpush1.xpose.msra.mxu0 0.0
    %1355 = vmatprep.subr.mxu0 0.0
    %1356 = vmatpush1.xpose.msra.mxu0 0.0
    %1357 = vmatprep.subr.mxu0 0.0
    %1358 = vmatpush1.xpose.msra.mxu0 0.0
    %1359 = vmatprep.subr.mxu0 0.0
    %1360 = vmatpush1.xpose.msra.mxu0 0.0
    %1361 = vmatprep.subr.mxu0 0.0
    %1362 = vmatpush1.xpose.msra.mxu0 0.0
    %1363 = vmatprep.subr.mxu0 0.0
    %1364 = vmatpush1.xpose.msra.mxu0 0.0
    %1365 = vmatprep.subr.mxu0 0.0
    %1366 = vmatpush1.xpose.msra.mxu0 0.0
    %1367 = vmatprep.mubr.f32.mxu0 0.0
    %1368 = vmatmul.mubr.f32.gmra.mrb[0].mxu0 %v1299
    %v1369 = vpop.f32.mrb[0].mxu0
    %v1370 = vadd.f32 0.0, %v1369
    %v1371 = vpop.f32.mrb[0].mxu0
    %1372 = vdwg.mxu0
    %1373 = vrot.lane.b32.xlu0 %v1288, 96
    %v1374 = vpop.permute.xlu0 %1373
    %v1375 = vsel %vm177, %v1288, 0
    %v1377 = vsel %vm177, %v1374, 0
    %1379 = vmatprep.subr.mxu0 0.0
    %1380 = vmatpush1.xpose.msra.mxu0 %v1377
    %1381 = vmatprep.subr.mxu0 0.0
    %1382 = vmatpush1.xpose.msra.mxu0 0.0
    %1383 = vmatprep.subr.mxu0 0.0
    %1384 = vmatpush1.xpose.msra.mxu0 0.0
    %1385 = vmatprep.subr.mxu0 0.0
    %1386 = vmatpush1.xpose.msra.mxu0 0.0
    %1387 = vmatprep.subr.mxu0 0.0
    %1388 = vmatpush1.xpose.msra.mxu0 0.0
    %1389 = vmatprep.subr.mxu0 0.0
    %1390 = vmatpush1.xpose.msra.mxu0 0.0
    %1391 = vmatprep.subr.mxu0 0.0
    %1392 = vmatpush1.xpose.msra.mxu0 0.0
    %1393 = vmatprep.subr.mxu0 0.0
    %1394 = vmatpush1.xpose.msra.mxu0 0.0
    %1395 = vmatprep.subr.mxu0 0.0
    %1396 = vmatpush1.xpose.msra.mxu0 0.0
    %1397 = vmatprep.subr.mxu0 0.0
    %1398 = vmatpush1.xpose.msra.mxu0 0.0
    %1399 = vmatprep.subr.mxu0 0.0
    %1400 = vmatpush1.xpose.msra.mxu0 0.0
    %1401 = vmatprep.subr.mxu0 0.0
    %1402 = vmatpush1.xpose.msra.mxu0 0.0
    %1403 = vmatprep.subr.mxu0 0.0
    %1404 = vmatpush1.xpose.msra.mxu0 0.0
    %1405 = vmatprep.subr.mxu0 0.0
    %1406 = vmatpush1.xpose.msra.mxu0 0.0
    %1407 = vmatprep.subr.mxu0 0.0
    %1408 = vmatpush1.xpose.msra.mxu0 0.0
    %1409 = vmatprep.subr.mxu0 0.0
    %1410 = vmatpush1.xpose.msra.mxu0 0.0
    %1411 = vmatprep.subr.mxu0 0.0
    %1412 = vmatpush1.xpose.msra.mxu0 0.0
    %1413 = vmatprep.subr.mxu0 0.0
    %1414 = vmatpush1.xpose.msra.mxu0 0.0
    %1415 = vmatprep.subr.mxu0 0.0
    %1416 = vmatpush1.xpose.msra.mxu0 0.0
    %1417 = vmatprep.subr.mxu0 0.0
    %1418 = vmatpush1.xpose.msra.mxu0 0.0
    %1419 = vmatprep.subr.mxu0 0.0
    %1420 = vmatpush1.xpose.msra.mxu0 0.0
    %1421 = vmatprep.subr.mxu0 0.0
    %1422 = vmatpush1.xpose.msra.mxu0 0.0
    %1423 = vmatprep.subr.mxu0 0.0
    %1424 = vmatpush1.xpose.msra.mxu0 0.0
    %1425 = vmatprep.subr.mxu0 0.0
    %1426 = vmatpush1.xpose.msra.mxu0 0.0
    %1427 = vmatprep.subr.mxu0 0.0
    %1428 = vmatpush1.xpose.msra.mxu0 0.0
    %1429 = vmatprep.subr.mxu0 0.0
    %1430 = vmatpush1.xpose.msra.mxu0 0.0
    %1431 = vmatprep.subr.mxu0 0.0
    %1432 = vmatpush1.xpose.msra.mxu0 0.0
    %1433 = vmatprep.subr.mxu0 0.0
    %1434 = vmatpush1.xpose.msra.mxu0 0.0
    %1435 = vmatprep.subr.mxu0 0.0
    %1436 = vmatpush1.xpose.msra.mxu0 0.0
    %1437 = vmatprep.subr.mxu0 0.0
    %1438 = vmatpush1.xpose.msra.mxu0 0.0
    %1439 = vmatprep.subr.mxu0 0.0
    %1440 = vmatpush1.xpose.msra.mxu0 0.0
    %1441 = vmatprep.subr.mxu0 0.0
    %1442 = vmatpush1.xpose.msra.mxu0 0.0
    %1443 = vmatprep.mubr.f32.mxu0 0.0
    %1444 = vmatmul.mubr.f32.gmra.mrb[0].mxu0 %v1375
    %v1445 = vpop.f32.mrb[0].mxu0
    %v1446 = vadd.f32 0.0, %v1445
    %v1447 = vpop.f32.mrb[0].mxu0
    %1448 = vdwg.mxu0
    %1449 = vrot.lane.b32.xlu0 %v1294, 96
    %v1450 = vpop.permute.xlu0 %1449
    %v1451 = vsel %vm177, %v1294, 0
    %v1453 = vsel %vm177, %v1450, 0
    %1455 = vmatprep.subr.mxu0 0.0
    %1456 = vmatpush1.xpose.msra.mxu0 %v1453
    %1457 = vmatprep.subr.mxu0 0.0
    %1458 = vmatpush1.xpose.msra.mxu0 0.0
    %1459 = vmatprep.subr.mxu0 0.0
    %1460 = vmatpush1.xpose.msra.mxu0 0.0
    %1461 = vmatprep.subr.mxu0 0.0
    %1462 = vmatpush1.xpose.msra.mxu0 0.0
    %1463 = vmatprep.subr.mxu0 0.0
    %1464 = vmatpush1.xpose.msra.mxu0 0.0
    %1465 = vmatprep.subr.mxu0 0.0
    %1466 = vmatpush1.xpose.msra.mxu0 0.0
    %1467 = vmatprep.subr.mxu0 0.0
    %1468 = vmatpush1.xpose.msra.mxu0 0.0
    %1469 = vmatprep.subr.mxu0 0.0
    %1470 = vmatpush1.xpose.msra.mxu0 0.0
    %1471 = vmatprep.subr.mxu0 0.0
    %1472 = vmatpush1.xpose.msra.mxu0 0.0
    %1473 = vmatprep.subr.mxu0 0.0
    %1474 = vmatpush1.xpose.msra.mxu0 0.0
    %1475 = vmatprep.subr.mxu0 0.0
    %1476 = vmatpush1.xpose.msra.mxu0 0.0
    %1477 = vmatprep.subr.mxu0 0.0
    %1478 = vmatpush1.xpose.msra.mxu0 0.0
    %1479 = vmatprep.subr.mxu0 0.0
    %1480 = vmatpush1.xpose.msra.mxu0 0.0
    %1481 = vmatprep.subr.mxu0 0.0
    %1482 = vmatpush1.xpose.msra.mxu0 0.0
    %1483 = vmatprep.subr.mxu0 0.0
    %1484 = vmatpush1.xpose.msra.mxu0 0.0
    %1485 = vmatprep.subr.mxu0 0.0
    %1486 = vmatpush1.xpose.msra.mxu0 0.0
    %1487 = vmatprep.subr.mxu0 0.0
    %1488 = vmatpush1.xpose.msra.mxu0 0.0
    %1489 = vmatprep.subr.mxu0 0.0
    %1490 = vmatpush1.xpose.msra.mxu0 0.0
    %1491 = vmatprep.subr.mxu0 0.0
    %1492 = vmatpush1.xpose.msra.mxu0 0.0
    %1493 = vmatprep.subr.mxu0 0.0
    %1494 = vmatpush1.xpose.msra.mxu0 0.0
    %1495 = vmatprep.subr.mxu0 0.0
    %1496 = vmatpush1.xpose.msra.mxu0 0.0
    %1497 = vmatprep.subr.mxu0 0.0
    %1498 = vmatpush1.xpose.msra.mxu0 0.0
    %1499 = vmatprep.subr.mxu0 0.0
    %1500 = vmatpush1.xpose.msra.mxu0 0.0
    %1501 = vmatprep.subr.mxu0 0.0
    %1502 = vmatpush1.xpose.msra.mxu0 0.0
    %1503 = vmatprep.subr.mxu0 0.0
    %1504 = vmatpush1.xpose.msra.mxu0 0.0
    %1505 = vmatprep.subr.mxu0 0.0
    %1506 = vmatpush1.xpose.msra.mxu0 0.0
    %1507 = vmatprep.subr.mxu0 0.0
    %1508 = vmatpush1.xpose.msra.mxu0 0.0
    %1509 = vmatprep.subr.mxu0 0.0
    %1510 = vmatpush1.xpose.msra.mxu0 0.0
    %1511 = vmatprep.subr.mxu0 0.0
    %1512 = vmatpush1.xpose.msra.mxu0 0.0
    %1513 = vmatprep.subr.mxu0 0.0
    %1514 = vmatpush1.xpose.msra.mxu0 0.0
    %1515 = vmatprep.subr.mxu0 0.0
    %1516 = vmatpush1.xpose.msra.mxu0 0.0
    %1517 = vmatprep.subr.mxu0 0.0
    %1518 = vmatpush1.xpose.msra.mxu0 0.0
    %1519 = vmatprep.mubr.f32.mxu0 0.0
    %1520 = vmatmul.mubr.f32.gmra.mrb[0].mxu0 %v1451
    %v1521 = vpop.f32.mrb[0].mxu0
    %v1522 = vadd.f32 0.0, %v1521
    %v1523 = vpop.f32.mrb[0].mxu0
    %1524 = vdwg.mxu0
    %1525 = vrot.lane.b32.xlu0 %v1296, 96
    %v1526 = vpop.permute.xlu0 %1525
    %v1527 = vsel %vm177, %v1296, 0
    %v1529 = vsel %vm177, %v1526, 0
    %1531 = vmatprep.subr.mxu0 0.0
    %1532 = vmatpush1.xpose.msra.mxu0 %v1529
    %1533 = vmatprep.subr.mxu0 0.0
    %1534 = vmatpush1.xpose.msra.mxu0 0.0
    %1535 = vmatprep.subr.mxu0 0.0
    %1536 = vmatpush1.xpose.msra.mxu0 0.0
    %1537 = vmatprep.subr.mxu0 0.0
    %1538 = vmatpush1.xpose.msra.mxu0 0.0
    %1539 = vmatprep.subr.mxu0 0.0
    %1540 = vmatpush1.xpose.msra.mxu0 0.0
    %1541 = vmatprep.subr.mxu0 0.0
    %1542 = vmatpush1.xpose.msra.mxu0 0.0
    %1543 = vmatprep.subr.mxu0 0.0
    %1544 = vmatpush1.xpose.msra.mxu0 0.0
    %1545 = vmatprep.subr.mxu0 0.0
    %1546 = vmatpush1.xpose.msra.mxu0 0.0
    %1547 = vmatprep.subr.mxu0 0.0
    %1548 = vmatpush1.xpose.msra.mxu0 0.0
    %1549 = vmatprep.subr.mxu0 0.0
    %1550 = vmatpush1.xpose.msra.mxu0 0.0
    %1551 = vmatprep.subr.mxu0 0.0
    %1552 = vmatpush1.xpose.msra.mxu0 0.0
    %1553 = vmatprep.subr.mxu0 0.0
    %1554 = vmatpush1.xpose.msra.mxu0 0.0
    %1555 = vmatprep.subr.mxu0 0.0
    %1556 = vmatpush1.xpose.msra.mxu0 0.0
    %1557 = vmatprep.subr.mxu0 0.0
    %1558 = vmatpush1.xpose.msra.mxu0 0.0
    %1559 = vmatprep.subr.mxu0 0.0
    %1560 = vmatpush1.xpose.msra.mxu0 0.0
    %1561 = vmatprep.subr.mxu0 0.0
    %1562 = vmatpush1.xpose.msra.mxu0 0.0
    %1563 = vmatprep.subr.mxu0 0.0
    %1564 = vmatpush1.xpose.msra.mxu0 0.0
    %1565 = vmatprep.subr.mxu0 0.0
    %1566 = vmatpush1.xpose.msra.mxu0 0.0
    %1567 = vmatprep.subr.mxu0 0.0
    %1568 = vmatpush1.xpose.msra.mxu0 0.0
    %1569 = vmatprep.subr.mxu0 0.0
    %1570 = vmatpush1.xpose.msra.mxu0 0.0
    %1571 = vmatprep.subr.mxu0 0.0
    %1572 = vmatpush1.xpose.msra.mxu0 0.0
    %1573 = vmatprep.subr.mxu0 0.0
    %1574 = vmatpush1.xpose.msra.mxu0 0.0
    %1575 = vmatprep.subr.mxu0 0.0
    %1576 = vmatpush1.xpose.msra.mxu0 0.0
    %1577 = vmatprep.subr.mxu0 0.0
    %1578 = vmatpush1.xpose.msra.mxu0 0.0
    %1579 = vmatprep.subr.mxu0 0.0
    %1580 = vmatpush1.xpose.msra.mxu0 0.0
    %1581 = vmatprep.subr.mxu0 0.0
    %1582 = vmatpush1.xpose.msra.mxu0 0.0
    %1583 = vmatprep.subr.mxu0 0.0
    %1584 = vmatpush1.xpose.msra.mxu0 0.0
    %1585 = vmatprep.subr.mxu0 0.0
    %1586 = vmatpush1.xpose.msra.mxu0 0.0
    %1587 = vmatprep.subr.mxu0 0.0
    %1588 = vmatpush1.xpose.msra.mxu0 0.0
    %1589 = vmatprep.subr.mxu0 0.0
    %1590 = vmatpush1.xpose.msra.mxu0 0.0
    %1591 = vmatprep.subr.mxu0 0.0
    %1592 = vmatpush1.xpose.msra.mxu0 0.0
    %1593 = vmatprep.subr.mxu0 0.0
    %1594 = vmatpush1.xpose.msra.mxu0 0.0
    %1595 = vmatprep.mubr.f32.mxu0 0.0
    %1596 = vmatmul.mubr.f32.gmra.mrb[0].mxu0 %v1527
    %v1597 = vpop.f32.mrb[0].mxu0
    %v1598 = vadd.f32 0.0, %v1597
    %v1599 = vpop.f32.mrb[0].mxu0
    %1600 = vdwg.mxu0
    %v1601 = vsel %vm480, %v1370, -inf
    %1602 = vmax.xlane.f32.xlu0 %v1601
    %v1603 = vpop.xlane.xlu0 %1602
    %v1604 = vsel %vm480, %v1446, -inf
    %1605 = vmax.xlane.f32.xlu0 %v1604
    %v1606 = vpop.xlane.xlu0 %1605
    %v1607 = vsel %vm480, %v1522, -inf
    %1608 = vmax.xlane.f32.xlu0 %v1607
    %v1609 = vpop.xlane.xlu0 %1608
    %v1610 = vsel %vm480, %v1598, -inf
    %1611 = vmax.xlane.f32.xlu0 %v1610
    %v1612 = vpop.xlane.xlu0 %1611
    %v1613 = vsub.f32 %v1370, %v1603
    %v1614 = vsub.f32 %v1446, %v1606
    %v1615 = vsub.f32 %v1522, %v1609
    %v1616 = vsub.f32 %v1598, %v1612
    %v1617 = vmul.f32 %v1613, 1.442695
    %v1618 = vpow.pop %v1617
    %v1619 = vmul.f32 %v1614, 1.442695
    %v1620 = vpow.pop %v1619
    %v1621 = vmul.f32 %v1615, 1.442695
    %v1622 = vpow.pop %v1621
    %v1623 = vmul.f32 %v1616, 1.442695
    %v1624 = vpow.pop %v1623
    %v1625 = vsel %vm480, %v1618, 0.0
    %1626 = vadd.xlane.f32.xlu0 %v1625
    %v1627 = vpop.xlane.xlu0 %1626
    %v1628 = vsel %vm480, %v1620, 0.0
    %1629 = vadd.xlane.f32.xlu0 %v1628
    %v1630 = vpop.xlane.xlu0 %1629
    %v1631 = vsel %vm480, %v1622, 0.0
    %1632 = vadd.xlane.f32.xlu0 %v1631
    %v1633 = vpop.xlane.xlu0 %1632
    %v1634 = vsel %vm480, %v1624, 0.0
    %1635 = vadd.xlane.f32.xlu0 %v1634
    %v1636 = vpop.xlane.xlu0 %1635
    %v1637 = vrcp.pop %v1627
    %v1638 = vrcp.pop %v1630
    %v1639 = vrcp.pop %v1633
    %v1640 = vrcp.pop %v1636
    %v1641 = vmul.f32 %v1618, %v1637
    %v1642 = vmul.f32 %v1620, %v1638
    %v1643 = vmul.f32 %v1622, %v1639
    %v1644 = vmul.f32 %v1624, %v1640
    %1645 = vrot.lane.b32.xlu0 %v1283, 64
    %v1646 = vpop.permute.xlu0 %1645
    %v1649 = vsel %vm480, %v1641, 0
    %1651 = vmatprep.subr.mxu0 0.0
    %1652 = vmatpush1.msra.mxu0 %v1646
    %1653 = vmatprep.subr.mxu0 0.0
    %1654 = vmatpush1.msra.mxu0 0.0
    %1655 = vmatprep.subr.mxu0 0.0
    %1656 = vmatpush1.msra.mxu0 0.0
    %1657 = vmatprep.subr.mxu0 0.0
    %1658 = vmatpush1.msra.mxu0 0.0
    %1659 = vmatprep.subr.mxu0 0.0
    %1660 = vmatpush1.msra.mxu0 0.0
    %1661 = vmatprep.subr.mxu0 0.0
    %1662 = vmatpush1.msra.mxu0 0.0
    %1663 = vmatprep.subr.mxu0 0.0
    %1664 = vmatpush1.msra.mxu0 0.0
    %1665 = vmatprep.subr.mxu0 0.0
    %1666 = vmatpush1.msra.mxu0 0.0
    %1667 = vmatprep.subr.mxu0 0.0
    %1668 = vmatpush1.msra.mxu0 0.0
    %1669 = vmatprep.subr.mxu0 0.0
    %1670 = vmatpush1.msra.mxu0 0.0
    %1671 = vmatprep.subr.mxu0 0.0
    %1672 = vmatpush1.msra.mxu0 0.0
    %1673 = vmatprep.subr.mxu0 0.0
    %1674 = vmatpush1.msra.mxu0 0.0
    %1675 = vmatprep.subr.mxu0 0.0
    %1676 = vmatpush1.msra.mxu0 0.0
    %1677 = vmatprep.subr.mxu0 0.0
    %1678 = vmatpush1.msra.mxu0 0.0
    %1679 = vmatprep.subr.mxu0 0.0
    %1680 = vmatpush1.msra.mxu0 0.0
    %1681 = vmatprep.subr.mxu0 0.0
    %1682 = vmatpush1.msra.mxu0 0.0
    %1683 = vmatprep.subr.mxu0 0.0
    %1684 = vmatpush1.msra.mxu0 0.0
    %1685 = vmatprep.subr.mxu0 0.0
    %1686 = vmatpush1.msra.mxu0 0.0
    %1687 = vmatprep.subr.mxu0 0.0
    %1688 = vmatpush1.msra.mxu0 0.0
    %1689 = vmatprep.subr.mxu0 0.0
    %1690 = vmatpush1.msra.mxu0 0.0
    %1691 = vmatprep.subr.mxu0 0.0
    %1692 = vmatpush1.msra.mxu0 0.0
    %1693 = vmatprep.subr.mxu0 0.0
    %1694 = vmatpush1.msra.mxu0 0.0
    %1695 = vmatprep.subr.mxu0 0.0
    %1696 = vmatpush1.msra.mxu0 0.0
    %1697 = vmatprep.subr.mxu0 0.0
    %1698 = vmatpush1.msra.mxu0 0.0
    %1699 = vmatprep.subr.mxu0 0.0
    %1700 = vmatpush1.msra.mxu0 0.0
    %1701 = vmatprep.subr.mxu0 0.0
    %1702 = vmatpush1.msra.mxu0 0.0
    %1703 = vmatprep.subr.mxu0 0.0
    %1704 = vmatpush1.msra.mxu0 0.0
    %1705 = vmatprep.subr.mxu0 0.0
    %1706 = vmatpush1.msra.mxu0 0.0
    %1707 = vmatprep.subr.mxu0 0.0
    %1708 = vmatpush1.msra.mxu0 0.0
    %1709 = vmatprep.subr.mxu0 0.0
    %1710 = vmatpush1.msra.mxu0 0.0
    %1711 = vmatprep.subr.mxu0 0.0
    %1712 = vmatpush1.msra.mxu0 0.0
    %1713 = vmatprep.subr.mxu0 0.0
    %1714 = vmatpush1.msra.mxu0 0.0
    %1715 = vmatprep.mubr.f32.mxu0 0.0
    %1716 = vmatmul.mubr.f32.gmra.mrb[0].mxu0 %v1649
    %v1717 = vpop.f32.mrb[0].mxu0
    %v1718 = vadd.f32 0.0, %v1717
    %v1719 = vpop.f32.mrb[0].mxu0
    %1720 = vdwg.mxu0
    %1721 = vrot.lane.b32.xlu0 %v1288, 64
    %v1722 = vpop.permute.xlu0 %1721
    %v1725 = vsel %vm480, %v1642, 0
    %1727 = vmatprep.subr.mxu0 0.0
    %1728 = vmatpush1.msra.mxu0 %v1722
    %1729 = vmatprep.subr.mxu0 0.0
    %1730 = vmatpush1.msra.mxu0 0.0
    %1731 = vmatprep.subr.mxu0 0.0
    %1732 = vmatpush1.msra.mxu0 0.0
    %1733 = vmatprep.subr.mxu0 0.0
    %1734 = vmatpush1.msra.mxu0 0.0
    %1735 = vmatprep.subr.mxu0 0.0
    %1736 = vmatpush1.msra.mxu0 0.0
    %1737 = vmatprep.subr.mxu0 0.0
    %1738 = vmatpush1.msra.mxu0 0.0
    %1739 = vmatprep.subr.mxu0 0.0
    %1740 = vmatpush1.msra.mxu0 0.0
    %1741 = vmatprep.subr.mxu0 0.0
    %1742 = vmatpush1.msra.mxu0 0.0
    %1743 = vmatprep.subr.mxu0 0.0
    %1744 = vmatpush1.msra.mxu0 0.0
    %1745 = vmatprep.subr.mxu0 0.0
    %1746 = vmatpush1.msra.mxu0 0.0
    %1747 = vmatprep.subr.mxu0 0.0
    %1748 = vmatpush1.msra.mxu0 0.0
    %1749 = vmatprep.subr.mxu0 0.0
    %1750 = vmatpush1.msra.mxu0 0.0
    %1751 = vmatprep.subr.mxu0 0.0
    %1752 = vmatpush1.msra.mxu0 0.0
    %1753 = vmatprep.subr.mxu0 0.0
    %1754 = vmatpush1.msra.mxu0 0.0
    %1755 = vmatprep.subr.mxu0 0.0
    %1756 = vmatpush1.msra.mxu0 0.0
    %1757 = vmatprep.subr.mxu0 0.0
    %1758 = vmatpush1.msra.mxu0 0.0
    %1759 = vmatprep.subr.mxu0 0.0
    %1760 = vmatpush1.msra.mxu0 0.0
    %1761 = vmatprep.subr.mxu0 0.0
    %1762 = vmatpush1.msra.mxu0 0.0
    %1763 = vmatprep.subr.mxu0 0.0
    %1764 = vmatpush1.msra.mxu0 0.0
    %1765 = vmatprep.subr.mxu0 0.0
    %1766 = vmatpush1.msra.mxu0 0.0
    %1767 = vmatprep.subr.mxu0 0.0
    %1768 = vmatpush1.msra.mxu0 0.0
    %1769 = vmatprep.subr.mxu0 0.0
    %1770 = vmatpush1.msra.mxu0 0.0
    %1771 = vmatprep.subr.mxu0 0.0
    %1772 = vmatpush1.msra.mxu0 0.0
    %1773 = vmatprep.subr.mxu0 0.0
    %1774 = vmatpush1.msra.mxu0 0.0
    %1775 = vmatprep.subr.mxu0 0.0
    %1776 = vmatpush1.msra.mxu0 0.0
    %1777 = vmatprep.subr.mxu0 0.0
    %1778 = vmatpush1.msra.mxu0 0.0
    %1779 = vmatprep.subr.mxu0 0.0
    %1780 = vmatpush1.msra.mxu0 0.0
    %1781 = vmatprep.subr.mxu0 0.0
    %1782 = vmatpush1.msra.mxu0 0.0
    %1783 = vmatprep.subr.mxu0 0.0
    %1784 = vmatpush1.msra.mxu0 0.0
    %1785 = vmatprep.subr.mxu0 0.0
    %1786 = vmatpush1.msra.mxu0 0.0
    %1787 = vmatprep.subr.mxu0 0.0
    %1788 = vmatpush1.msra.mxu0 0.0
    %1789 = vmatprep.subr.mxu0 0.0
    %1790 = vmatpush1.msra.mxu0 0.0
    %1791 = vmatprep.mubr.f32.mxu0 0.0
    %1792 = vmatmul.mubr.f32.gmra.mrb[0].mxu0 %v1725
    %v1793 = vpop.f32.mrb[0].mxu0
    %v1794 = vadd.f32 0.0, %v1793
    %v1795 = vpop.f32.mrb[0].mxu0
    %1796 = vdwg.mxu0
    %1797 = vrot.lane.b32.xlu0 %v1294, 64
    %v1798 = vpop.permute.xlu0 %1797
    %v1801 = vsel %vm480, %v1643, 0
    %1803 = vmatprep.subr.mxu0 0.0
    %1804 = vmatpush1.msra.mxu0 %v1798
    %1805 = vmatprep.subr.mxu0 0.0
    %1806 = vmatpush1.msra.mxu0 0.0
    %1807 = vmatprep.subr.mxu0 0.0
    %1808 = vmatpush1.msra.mxu0 0.0
    %1809 = vmatprep.subr.mxu0 0.0
    %1810 = vmatpush1.msra.mxu0 0.0
    %1811 = vmatprep.subr.mxu0 0.0
    %1812 = vmatpush1.msra.mxu0 0.0
    %1813 = vmatprep.subr.mxu0 0.0
    %1814 = vmatpush1.msra.mxu0 0.0
    %1815 = vmatprep.subr.mxu0 0.0
    %1816 = vmatpush1.msra.mxu0 0.0
    %1817 = vmatprep.subr.mxu0 0.0
    %1818 = vmatpush1.msra.mxu0 0.0
    %1819 = vmatprep.subr.mxu0 0.0
    %1820 = vmatpush1.msra.mxu0 0.0
    %1821 = vmatprep.subr.mxu0 0.0
    %1822 = vmatpush1.msra.mxu0 0.0
    %1823 = vmatprep.subr.mxu0 0.0
    %1824 = vmatpush1.msra.mxu0 0.0
    %1825 = vmatprep.subr.mxu0 0.0
    %1826 = vmatpush1.msra.mxu0 0.0
    %1827 = vmatprep.subr.mxu0 0.0
    %1828 = vmatpush1.msra.mxu0 0.0
    %1829 = vmatprep.subr.mxu0 0.0
    %1830 = vmatpush1.msra.mxu0 0.0
    %1831 = vmatprep.subr.mxu0 0.0
    %1832 = vmatpush1.msra.mxu0 0.0
    %1833 = vmatprep.subr.mxu0 0.0
    %1834 = vmatpush1.msra.mxu0 0.0
    %1835 = vmatprep.subr.mxu0 0.0
    %1836 = vmatpush1.msra.mxu0 0.0
    %1837 = vmatprep.subr.mxu0 0.0
    %1838 = vmatpush1.msra.mxu0 0.0
    %1839 = vmatprep.subr.mxu0 0.0
    %1840 = vmatpush1.msra.mxu0 0.0
    %1841 = vmatprep.subr.mxu0 0.0
    %1842 = vmatpush1.msra.mxu0 0.0
    %1843 = vmatprep.subr.mxu0 0.0
    %1844 = vmatpush1.msra.mxu0 0.0
    %1845 = vmatprep.subr.mxu0 0.0
    %1846 = vmatpush1.msra.mxu0 0.0
    %1847 = vmatprep.subr.mxu0 0.0
    %1848 = vmatpush1.msra.mxu0 0.0
    %1849 = vmatprep.subr.mxu0 0.0
    %1850 = vmatpush1.msra.mxu0 0.0
    %1851 = vmatprep.subr.mxu0 0.0
    %1852 = vmatpush1.msra.mxu0 0.0
    %1853 = vmatprep.subr.mxu0 0.0
    %1854 = vmatpush1.msra.mxu0 0.0
    %1855 = vmatprep.subr.mxu0 0.0
    %1856 = vmatpush1.msra.mxu0 0.0
    %1857 = vmatprep.subr.mxu0 0.0
    %1858 = vmatpush1.msra.mxu0 0.0
    %1859 = vmatprep.subr.mxu0 0.0
    %1860 = vmatpush1.msra.mxu0 0.0
    %1861 = vmatprep.subr.mxu0 0.0
    %1862 = vmatpush1.msra.mxu0 0.0
    %1863 = vmatprep.subr.mxu0 0.0
    %1864 = vmatpush1.msra.mxu0 0.0
    %1865 = vmatprep.subr.mxu0 0.0
    %1866 = vmatpush1.msra.mxu0 0.0
    %1867 = vmatprep.mubr.f32.mxu0 0.0
    %1868 = vmatmul.mubr.f32.gmra.mrb[0].mxu0 %v1801
    %v1869 = vpop.f32.mrb[0].mxu0
    %v1870 = vadd.f32 0.0, %v1869
    %v1871 = vpop.f32.mrb[0].mxu0
    %1872 = vdwg.mxu0
    %1873 = vrot.lane.b32.xlu0 %v1296, 64
    %v1874 = vpop.permute.xlu0 %1873
    %v1877 = vsel %vm480, %v1644, 0
    %1879 = vmatprep.subr.mxu0 0.0
    %1880 = vmatpush1.msra.mxu0 %v1874
    %1881 = vmatprep.subr.mxu0 0.0
    %1882 = vmatpush1.msra.mxu0 0.0
    %1883 = vmatprep.subr.mxu0 0.0
    %1884 = vmatpush1.msra.mxu0 0.0
    %1885 = vmatprep.subr.mxu0 0.0
    %1886 = vmatpush1.msra.mxu0 0.0
    %1887 = vmatprep.subr.mxu0 0.0
    %1888 = vmatpush1.msra.mxu0 0.0
    %1889 = vmatprep.subr.mxu0 0.0
    %1890 = vmatpush1.msra.mxu0 0.0
    %1891 = vmatprep.subr.mxu0 0.0
    %1892 = vmatpush1.msra.mxu0 0.0
    %1893 = vmatprep.subr.mxu0 0.0
    %1894 = vmatpush1.msra.mxu0 0.0
    %1895 = vmatprep.subr.mxu0 0.0
    %1896 = vmatpush1.msra.mxu0 0.0
    %1897 = vmatprep.subr.mxu0 0.0
    %1898 = vmatpush1.msra.mxu0 0.0
    %1899 = vmatprep.subr.mxu0 0.0
    %1900 = vmatpush1.msra.mxu0 0.0
    %1901 = vmatprep.subr.mxu0 0.0
    %1902 = vmatpush1.msra.mxu0 0.0
    %1903 = vmatprep.subr.mxu0 0.0
    %1904 = vmatpush1.msra.mxu0 0.0
    %1905 = vmatprep.subr.mxu0 0.0
    %1906 = vmatpush1.msra.mxu0 0.0
    %1907 = vmatprep.subr.mxu0 0.0
    %1908 = vmatpush1.msra.mxu0 0.0
    %1909 = vmatprep.subr.mxu0 0.0
    %1910 = vmatpush1.msra.mxu0 0.0
    %1911 = vmatprep.subr.mxu0 0.0
    %1912 = vmatpush1.msra.mxu0 0.0
    %1913 = vmatprep.subr.mxu0 0.0
    %1914 = vmatpush1.msra.mxu0 0.0
    %1915 = vmatprep.subr.mxu0 0.0
    %1916 = vmatpush1.msra.mxu0 0.0
    %1917 = vmatprep.subr.mxu0 0.0
    %1918 = vmatpush1.msra.mxu0 0.0
    %1919 = vmatprep.subr.mxu0 0.0
    %1920 = vmatpush1.msra.mxu0 0.0
    %1921 = vmatprep.subr.mxu0 0.0
    %1922 = vmatpush1.msra.mxu0 0.0
    %1923 = vmatprep.subr.mxu0 0.0
    %1924 = vmatpush1.msra.mxu0 0.0
    %1925 = vmatprep.subr.mxu0 0.0
    %1926 = vmatpush1.msra.mxu0 0.0
    %1927 = vmatprep.subr.mxu0 0.0
    %1928 = vmatpush1.msra.mxu0 0.0
    %1929 = vmatprep.subr.mxu0 0.0
    %1930 = vmatpush1.msra.mxu0 0.0
    %1931 = vmatprep.subr.mxu0 0.0
    %1932 = vmatpush1.msra.mxu0 0.0
    %1933 = vmatprep.subr.mxu0 0.0
    %1934 = vmatpush1.msra.mxu0 0.0
    %1935 = vmatprep.subr.mxu0 0.0
    %1936 = vmatpush1.msra.mxu0 0.0
    %1937 = vmatprep.subr.mxu0 0.0
    %1938 = vmatpush1.msra.mxu0 0.0
    %1939 = vmatprep.subr.mxu0 0.0
    %1940 = vmatpush1.msra.mxu0 0.0
    %1941 = vmatprep.subr.mxu0 0.0
    %1942 = vmatpush1.msra.mxu0 0.0
    %1943 = vmatprep.mubr.f32.mxu0 0.0
    %1944 = vmatmul.mubr.f32.gmra.mrb[0].mxu0 %v1877
    %v1945 = vpop.f32.mrb[0].mxu0
    %v1946 = vadd.f32 0.0, %v1945
    %v1947 = vpop.f32.mrb[0].mxu0
    %1948 = vdwg.mxu0
    %1951 = vrot.lane.b32.xlu0 %v1870, 16
    %v1952 = vpop.permute.xlu0 %1951
    %1953 = vrot.lane.b32.xlu0 %v1946, 16
    %v1954 = vpop.permute.xlu0 %1953
    %v1957 = vsel %vm177, %v1718, %v1952
    %v1958 = vsel %vm177, %v1794, %v1954
    %v1959 = vld [vmem:[#allocation5 + $0x138] sm:$0xff]
    %v1960 = vld [vmem:[#allocation5 + $0x140] sm:$0xff]
    %v1961 = vld [vmem:[#allocation5 + $0x148] sm:$0xff]
    %v1962 = vld [vmem:[#allocation5 + $0x150] sm:$0xff]
    %v1963 = vld [vmem:[#allocation5 + $0x158] sm:$0x1]
    %v1964 = vlaneseq
    %v1965 = vshrl.u32 %v1964, 7
    %v1966 = vsub.s32 0, %v1965
    %v1967 = vrot.slane %v1963, %v1966
    %v1969 = vsel %vm87, %v1957, 0
    %v1972 = vsel %vm87, %v1958, 0
    %1974 = vmatprep.subr.mxu0 0.0
    %1975 = vmatpush1.msra.mxu0 %v1959
    %1976 = vmatprep.subr.mxu0 0.0
    %1977 = vmatpush1.msra.mxu0 %v1960
    %1978 = vmatprep.subr.mxu0 0.0
    %1979 = vmatpush1.msra.mxu0 %v1961
    %1980 = vmatprep.subr.mxu0 0.0
    %1981 = vmatpush1.msra.mxu0 %v1962
    %1982 = vmatprep.subr.mxu0 0.0
    %1983 = vmatpush1.msra.mxu0 0.0
    %1984 = vmatprep.subr.mxu0 0.0
    %1985 = vmatpush1.msra.mxu0 0.0
    %1986 = vmatprep.subr.mxu0 0.0
    %1987 = vmatpush1.msra.mxu0 0.0
    %1988 = vmatprep.subr.mxu0 0.0
    %1989 = vmatpush1.msra.mxu0 0.0
    %1990 = vmatprep.subr.mxu0 0.0
    %1991 = vmatpush1.msra.mxu0 0.0
    %1992 = vmatprep.subr.mxu0 0.0
    %1993 = vmatpush1.msra.mxu0 0.0
    %1994 = vmatprep.subr.mxu0 0.0
    %1995 = vmatpush1.msra.mxu0 0.0
    %1996 = vmatprep.subr.mxu0 0.0
    %1997 = vmatpush1.msra.mxu0 0.0
    %1998 = vmatprep.subr.mxu0 0.0
    %1999 = vmatpush1.msra.mxu0 0.0
    %2000 = vmatprep.subr.mxu0 0.0
    %2001 = vmatpush1.msra.mxu0 0.0
    %2002 = vmatprep.subr.mxu0 0.0
    %2003 = vmatpush1.msra.mxu0 0.0
    %2004 = vmatprep.subr.mxu0 0.0
    %2005 = vmatpush1.msra.mxu0 0.0
    %2006 = vmatprep.subr.mxu0 0.0
    %2007 = vmatpush1.msra.mxu0 0.0
    %2008 = vmatprep.subr.mxu0 0.0
    %2009 = vmatpush1.msra.mxu0 0.0
    %2010 = vmatprep.subr.mxu0 0.0
    %2011 = vmatpush1.msra.mxu0 0.0
    %2012 = vmatprep.subr.mxu0 0.0
    %2013 = vmatpush1.msra.mxu0 0.0
    %2014 = vmatprep.subr.mxu0 0.0
    %2015 = vmatpush1.msra.mxu0 0.0
    %2016 = vmatprep.subr.mxu0 0.0
    %2017 = vmatpush1.msra.mxu0 0.0
    %2018 = vmatprep.subr.mxu0 0.0
    %2019 = vmatpush1.msra.mxu0 0.0
    %2020 = vmatprep.subr.mxu0 0.0
    %2021 = vmatpush1.msra.mxu0 0.0
    %2022 = vmatprep.subr.mxu0 0.0
    %2023 = vmatpush1.msra.mxu0 0.0
    %2024 = vmatprep.subr.mxu0 0.0
    %2025 = vmatpush1.msra.mxu0 0.0
    %2026 = vmatprep.subr.mxu0 0.0
    %2027 = vmatpush1.msra.mxu0 0.0
    %2028 = vmatprep.subr.mxu0 0.0
    %2029 = vmatpush1.msra.mxu0 0.0
    %2030 = vmatprep.subr.mxu0 0.0
    %2031 = vmatpush1.msra.mxu0 0.0
    %2032 = vmatprep.subr.mxu0 0.0
    %2033 = vmatpush1.msra.mxu0 0.0
    %2034 = vmatprep.subr.mxu0 0.0
    %2035 = vmatpush1.msra.mxu0 0.0
    %2036 = vmatprep.subr.mxu0 0.0
    %2037 = vmatpush1.msra.mxu0 0.0
    %2038 = vmatprep.mubr.f32.mxu0 0.0
    %2039 = vmatmul.mubr.f32.gmra.mrb[0].mxu0 %v1969
    %v2040 = vpop.f32.mrb[0].mxu0
    %v2041 = vadd.f32 %v1967, %v2040
    %v2042 = vpop.f32.mrb[0].mxu0
    %2043 = vmatprep.mubr.f32.mxu0 0.0
    %2044 = vmatmul.mubr.f32.gmra.mrb[0].mxu0 %v1972
    %v2045 = vpop.f32.mrb[0].mxu0
    %v2046 = vadd.f32 %v1967, %v2045
    %v2047 = vpop.f32.mrb[0].mxu0
    %2048 = vdwg.mxu0
    %v2049 = vadd.f32 %v1199, %v2041
    %v2050 = vadd.f32 %v1200, %v2046
    %v2051 = vld [vmem:[#allocation5 + $0x1d0] sm:$0x1]
    %v2052 = vld [vmem:[#allocation5 + $0x1d8] sm:$0x1]
    %v2053 = vsel %vm87, %v2049, 0.0
    %2054 = vadd.xlane.f32.xlu0 %v2053
    %v2055 = vpop.xlane.xlu0 %2054
    %v2056 = vsel %vm87, %v2050, 0.0
    %2057 = vadd.xlane.f32.xlu0 %v2056
    %v2058 = vpop.xlane.xlu0 %2057
    %v2059 = vmul.f32 %v2055, %v939
    %v2060 = vmul.f32 %v2058, %v939
    %v2061 = vsub.f32 %v2049, %v2059
    %v2062 = vsub.f32 %v2050, %v2060
    %v2063 = vmul.f32 %v2061, %v2061
    %v2064 = vmul.f32 %v2062, %v2062
    %v2065 = vsel %vm87, %v2063, 0.0
    %2066 = vadd.xlane.f32.xlu0 %v2065
    %v2067 = vpop.xlane.xlu0 %2066
    %v2068 = vsel %vm87, %v2064, 0.0
    %2069 = vadd.xlane.f32.xlu0 %v2068
    %v2070 = vpop.xlane.xlu0 %2069
    %v2071 = vmul.f32 %v2067, %v939
    %v2072 = vmul.f32 %v2070, %v939
    %v2073 = vadd.f32 %v2071, 1e-05
    %v2074 = vadd.f32 %v2072, 1e-05
    %v2075 = vrsqrt.pop %v2073
    %v2076 = vrsqrt.pop %v2074
    %v2077 = vmul.f32 %v2061, %v2075
    %v2078 = vmul.f32 %v2062, %v2076
    %v2079 = vlaneseq
    %v2080 = vshrl.u32 %v2079, 7
    %v2081 = vsub.s32 0, %v2080
    %v2082 = vrot.slane %v2051, %v2081
    %v2083 = vmul.f32 %v2077, %v2082
    %v2084 = vmul.f32 %v2078, %v2082
    %v2085 = vlaneseq
    %v2086 = vshrl.u32 %v2085, 7
    %v2087 = vsub.s32 0, %v2086
    %v2088 = vrot.slane %v2052, %v2087
    %v2089 = vadd.f32 %v2083, %v2088
    %v2090 = vadd.f32 %v2084, %v2088
    %v2091 = vld [vmem:[#allocation5 + $0x160] sm:$0xff]
    %v2092 = vld [vmem:[#allocation5 + $0x168] sm:$0xff]
    %v2093 = vld [vmem:[#allocation5 + $0x170] sm:$0xff]
    %v2094 = vld [vmem:[#allocation5 + $0x178] sm:$0xff]
    %v2095 = vld [vmem:[#allocation5 + $0x180] sm:$0x1]
    %v2096 = vlaneseq
    %v2097 = vshrl.u32 %v2096, 7
    %v2098 = vsub.s32 0, %v2097
    %v2099 = vrot.slane %v2095, %v2098
    %v2101 = vsel %vm87, %v2089, 0
    %v2104 = vsel %vm87, %v2090, 0
    %2106 = vmatprep.subr.mxu0 0.0
    %2107 = vmatpush1.msra.mxu0 %v2091
    %2108 = vmatprep.subr.mxu0 0.0
    %2109 = vmatpush1.msra.mxu0 %v2092
    %2110 = vmatprep.subr.mxu0 0.0
    %2111 = vmatpush1.msra.mxu0 %v2093
    %2112 = vmatprep.subr.mxu0 0.0
    %2113 = vmatpush1.msra.mxu0 %v2094
    %2114 = vmatprep.subr.mxu0 0.0
    %2115 = vmatpush1.msra.mxu0 0.0
    %2116 = vmatprep.subr.mxu0 0.0
    %2117 = vmatpush1.msra.mxu0 0.0
    %2118 = vmatprep.subr.mxu0 0.0
    %2119 = vmatpush1.msra.mxu0 0.0
    %2120 = vmatprep.subr.mxu0 0.0
    %2121 = vmatpush1.msra.mxu0 0.0
    %2122 = vmatprep.subr.mxu0 0.0
    %2123 = vmatpush1.msra.mxu0 0.0
    %2124 = vmatprep.subr.mxu0 0.0
    %2125 = vmatpush1.msra.mxu0 0.0
    %2126 = vmatprep.subr.mxu0 0.0
    %2127 = vmatpush1.msra.mxu0 0.0
    %2128 = vmatprep.subr.mxu0 0.0
    %2129 = vmatpush1.msra.mxu0 0.0
    %2130 = vmatprep.subr.mxu0 0.0
    %2131 = vmatpush1.msra.mxu0 0.0
    %2132 = vmatprep.subr.mxu0 0.0
    %2133 = vmatpush1.msra.mxu0 0.0
    %2134 = vmatprep.subr.mxu0 0.0
    %2135 = vmatpush1.msra.mxu0 0.0
    %2136 = vmatprep.subr.mxu0 0.0
    %2137 = vmatpush1.msra.mxu0 0.0
    %2138 = vmatprep.subr.mxu0 0.0
    %2139 = vmatpush1.msra.mxu0 0.0
    %2140 = vmatprep.subr.mxu0 0.0
    %2141 = vmatpush1.msra.mxu0 0.0
    %2142 = vmatprep.subr.mxu0 0.0
    %2143 = vmatpush1.msra.mxu0 0.0
    %2144 = vmatprep.subr.mxu0 0.0
    %2145 = vmatpush1.msra.mxu0 0.0
    %2146 = vmatprep.subr.mxu0 0.0
    %2147 = vmatpush1.msra.mxu0 0.0
    %2148 = vmatprep.subr.mxu0 0.0
    %2149 = vmatpush1.msra.mxu0 0.0
    %2150 = vmatprep.subr.mxu0 0.0
    %2151 = vmatpush1.msra.mxu0 0.0
    %2152 = vmatprep.subr.mxu0 0.0
    %2153 = vmatpush1.msra.mxu0 0.0
    %2154 = vmatprep.subr.mxu0 0.0
    %2155 = vmatpush1.msra.mxu0 0.0
    %2156 = vmatprep.subr.mxu0 0.0
    %2157 = vmatpush1.msra.mxu0 0.0
    %2158 = vmatprep.subr.mxu0 0.0
    %2159 = vmatpush1.msra.mxu0 0.0
    %2160 = vmatprep.subr.mxu0 0.0
    %2161 = vmatpush1.msra.mxu0 0.0
    %2162 = vmatprep.subr.mxu0 0.0
    %2163 = vmatpush1.msra.mxu0 0.0
    %2164 = vmatprep.subr.mxu0 0.0
    %2165 = vmatpush1.msra.mxu0 0.0
    %2166 = vmatprep.subr.mxu0 0.0
    %2167 = vmatpush1.msra.mxu0 0.0
    %2168 = vmatprep.subr.mxu0 0.0
    %2169 = vmatpush1.msra.mxu0 0.0
    %2170 = vmatprep.mubr.f32.mxu0 0.0
    %2171 = vmatmul.mubr.f32.gmra.mrb[0].mxu0 %v2101
    %v2172 = vpop.f32.mrb[0].mxu0
    %v2173 = vadd.f32 %v2099, %v2172
    %v2174 = vpop.f32.mrb[0].mxu0
    %2175 = vmatprep.mubr.f32.mxu0 0.0
    %2176 = vmatmul.mubr.f32.gmra.mrb[0].mxu0 %v2104
    %v2177 = vpop.f32.mrb[0].mxu0
    %v2178 = vadd.f32 %v2099, %v2177
    %v2179 = vpop.f32.mrb[0].mxu0
    %2180 = vdwg.mxu0
    %v2181 = vmax.f32 %v2173, 0.0
    %v2182 = vmax.f32 %v2178, 0.0
    %v2183 = vld [vmem:[#allocation5 + $0x188] sm:$0xff]
    %v2184 = vld [vmem:[#allocation5 + $0x190] sm:$0xff]
    %v2185 = vld [vmem:[#allocation5 + $0x198] sm:$0xff]
    %v2186 = vld [vmem:[#allocation5 + $0x1a0] sm:$0xff]
    %v2187 = vld [vmem:[#allocation5 + $0x1a8] sm:$0xff]
    %v2188 = vld [vmem:[#allocation5 + $0x1b0] sm:$0xff]
    %v2189 = vld [vmem:[#allocation5 + $0x1b8] sm:$0xff]
    %v2190 = vld [vmem:[#allocation5 + $0x1c0] sm:$0xff]
    %v2191 = vld [vmem:[#allocation5 + $0x1c8] sm:$0x1]
    %v2192 = vlaneseq
    %v2193 = vshrl.u32 %v2192, 7
    %v2194 = vsub.s32 0, %v2193
    %v2195 = vrot.slane %v2191, %v2194
    %v2197 = vsel %vm1077, %v2181, 0
    %v2200 = vsel %vm1077, %v2182, 0
    %2202 = vmatprep.subr.mxu0 0.0
    %2203 = vmatpush1.msra.mxu0 %v2183
    %2204 = vmatprep.subr.mxu0 0.0
    %2205 = vmatpush1.msra.mxu0 %v2184
    %2206 = vmatprep.subr.mxu0 0.0
    %2207 = vmatpush1.msra.mxu0 %v2185
    %2208 = vmatprep.subr.mxu0 0.0
    %2209 = vmatpush1.msra.mxu0 %v2186
    %2210 = vmatprep.subr.mxu0 0.0
    %2211 = vmatpush1.msra.mxu0 %v2187
    %2212 = vmatprep.subr.mxu0 0.0
    %2213 = vmatpush1.msra.mxu0 %v2188
    %2214 = vmatprep.subr.mxu0 0.0
    %2215 = vmatpush1.msra.mxu0 %v2189
    %2216 = vmatprep.subr.mxu0 0.0
    %2217 = vmatpush1.msra.mxu0 %v2190
    %2218 = vmatprep.subr.mxu0 0.0
    %2219 = vmatpush1.msra.mxu0 0.0
    %2220 = vmatprep.subr.mxu0 0.0
    %2221 = vmatpush1.msra.mxu0 0.0
    %2222 = vmatprep.subr.mxu0 0.0
    %2223 = vmatpush1.msra.mxu0 0.0
    %2224 = vmatprep.subr.mxu0 0.0
    %2225 = vmatpush1.msra.mxu0 0.0
    %2226 = vmatprep.subr.mxu0 0.0
    %2227 = vmatpush1.msra.mxu0 0.0
    %2228 = vmatprep.subr.mxu0 0.0
    %2229 = vmatpush1.msra.mxu0 0.0
    %2230 = vmatprep.subr.mxu0 0.0
    %2231 = vmatpush1.msra.mxu0 0.0
    %2232 = vmatprep.subr.mxu0 0.0
    %2233 = vmatpush1.msra.mxu0 0.0
    %2234 = vmatprep.subr.mxu0 0.0
    %2235 = vmatpush1.msra.mxu0 0.0
    %2236 = vmatprep.subr.mxu0 0.0
    %2237 = vmatpush1.msra.mxu0 0.0
    %2238 = vmatprep.subr.mxu0 0.0
    %2239 = vmatpush1.msra.mxu0 0.0
    %2240 = vmatprep.subr.mxu0 0.0
    %2241 = vmatpush1.msra.mxu0 0.0
    %2242 = vmatprep.subr.mxu0 0.0
    %2243 = vmatpush1.msra.mxu0 0.0
    %2244 = vmatprep.subr.mxu0 0.0
    %2245 = vmatpush1.msra.mxu0 0.0
    %2246 = vmatprep.subr.mxu0 0.0
    %2247 = vmatpush1.msra.mxu0 0.0
    %2248 = vmatprep.subr.mxu0 0.0
    %2249 = vmatpush1.msra.mxu0 0.0
    %2250 = vmatprep.subr.mxu0 0.0
    %2251 = vmatpush1.msra.mxu0 0.0
    %2252 = vmatprep.subr.mxu0 0.0
    %2253 = vmatpush1.msra.mxu0 0.0
    %2254 = vmatprep.subr.mxu0 0.0
    %2255 = vmatpush1.msra.mxu0 0.0
    %2256 = vmatprep.subr.mxu0 0.0
    %2257 = vmatpush1.msra.mxu0 0.0
    %2258 = vmatprep.subr.mxu0 0.0
    %2259 = vmatpush1.msra.mxu0 0.0
    %2260 = vmatprep.subr.mxu0 0.0
    %2261 = vmatpush1.msra.mxu0 0.0
    %2262 = vmatprep.subr.mxu0 0.0
    %2263 = vmatpush1.msra.mxu0 0.0
    %2264 = vmatprep.subr.mxu0 0.0
    %2265 = vmatpush1.msra.mxu0 0.0
    %2266 = vmatprep.mubr.f32.mxu0 0.0
    %2267 = vmatmul.mubr.f32.gmra.mrb[0].mxu0 %v2197
    %v2268 = vpop.f32.mrb[0].mxu0
    %v2269 = vadd.f32 %v2195, %v2268
    %v2270 = vpop.f32.mrb[0].mxu0
    %2271 = vmatprep.mubr.f32.mxu0 0.0
    %2272 = vmatmul.mubr.f32.gmra.mrb[0].mxu0 %v2200
    %v2273 = vpop.f32.mrb[0].mxu0
    %v2274 = vadd.f32 %v2195, %v2273
    %v2275 = vpop.f32.mrb[0].mxu0
    %2276 = vdwg.mxu0
    %v2277 = vadd.f32 %v2089, %v2269
    %v2278 = vadd.f32 %v2090, %v2274
    %v2279 = vld [vmem:[#allocation5 + $0x1e0] sm:$0x1]
    %v2280 = vld [vmem:[#allocation5 + $0x1e8] sm:$0x1]
    %v2281 = vsel %vm87, %v2277, 0.0
    %2282 = vadd.xlane.f32.xlu0 %v2281
    %v2283 = vpop.xlane.xlu0 %2282
    %v2284 = vsel %vm87, %v2278, 0.0
    %2285 = vadd.xlane.f32.xlu0 %v2284
    %v2286 = vpop.xlane.xlu0 %2285
    %v2287 = vmul.f32 %v2283, %v939
    %v2288 = vmul.f32 %v2286, %v939
    %v2289 = vsub.f32 %v2277, %v2287
    %v2290 = vsub.f32 %v2278, %v2288
    %v2291 = vmul.f32 %v2289, %v2289
    %v2292 = vmul.f32 %v2290, %v2290
    %v2293 = vsel %vm87, %v2291, 0.0
    %2294 = vadd.xlane.f32.xlu0 %v2293
    %v2295 = vpop.xlane.xlu0 %2294
    %v2296 = vsel %vm87, %v2292, 0.0
    %2297 = vadd.xlane.f32.xlu0 %v2296
    %v2298 = vpop.xlane.xlu0 %2297
    %v2299 = vmul.f32 %v2295, %v939
    %v2300 = vmul.f32 %v2298, %v939
    %v2301 = vadd.f32 %v2299, 1e-05
    %v2302 = vadd.f32 %v2300, 1e-05
    %v2303 = vrsqrt.pop %v2301
    %v2304 = vrsqrt.pop %v2302
    %v2305 = vmul.f32 %v2289, %v2303
    %v2306 = vmul.f32 %v2290, %v2304
    %v2307 = vlaneseq
    %v2308 = vshrl.u32 %v2307, 7
    %v2309 = vsub.s32 0, %v2308
    %v2310 = vrot.slane %v2279, %v2309
    %v2311 = vmul.f32 %v2305, %v2310
    %v2312 = vmul.f32 %v2306, %v2310
    %v2313 = vlaneseq
    %v2314 = vshrl.u32 %v2313, 7
    %v2315 = vsub.s32 0, %v2314
    %v2316 = vrot.slane %v2280, %v2315
    %v2317 = vadd.f32 %v2311, %v2316
    %v2318 = vadd.f32 %v2312, %v2316
    %v2319 = vld [vmem:[#allocation5 + $0x8] sm:$0xff]
    %v2320 = vld [vmem:[#allocation5 + $0x10] sm:$0xff]
    %v2321 = vld [vmem:[#allocation5 + $0x18] sm:$0xff]
    %v2322 = vld [vmem:[#allocation5 + $0x20] sm:$0xff]
    %v2323 = vld [vmem:[#allocation5 + $0x28] sm:$0x1]
    %v2324 = vlaneseq
    %v2325 = vshrl.u32 %v2324, 7
    %v2326 = vsub.s32 0, %v2325
    %v2327 = vrot.slane %v2323, %v2326
    %v2330 = vrot.slane %v2317, 7
    %v2331 = vrot.slane %v2318, 6
    %vm2332 = vcmask 1041409
    %v2333 = vsel %vm2332, %v2331, %v2330
    %v2334 = vsel %vm87, %v2333, 0
    %2336 = vmatprep.subr.mxu0 0.0
    %2337 = vmatpush1.msra.mxu0 %v2319
    %2338 = vmatprep.subr.mxu0 0.0
    %2339 = vmatpush1.msra.mxu0 %v2320
    %2340 = vmatprep.subr.mxu0 0.0
    %2341 = vmatpush1.msra.mxu0 %v2321
    %2342 = vmatprep.subr.mxu0 0.0
    %2343 = vmatpush1.msra.mxu0 %v2322
    %2344 = vmatprep.subr.mxu0 0.0
    %2345 = vmatpush1.msra.mxu0 0.0
    %2346 = vmatprep.subr.mxu0 0.0
    %2347 = vmatpush1.msra.mxu0 0.0
    %2348 = vmatprep.subr.mxu0 0.0
    %2349 = vmatpush1.msra.mxu0 0.0
    %2350 = vmatprep.subr.mxu0 0.0
    %2351 = vmatpush1.msra.mxu0 0.0
    %2352 = vmatprep.subr.mxu0 0.0
    %2353 = vmatpush1.msra.mxu0 0.0
    %2354 = vmatprep.subr.mxu0 0.0
    %2355 = vmatpush1.msra.mxu0 0.0
    %2356 = vmatprep.subr.mxu0 0.0
    %2357 = vmatpush1.msra.mxu0 0.0
    %2358 = vmatprep.subr.mxu0 0.0
    %2359 = vmatpush1.msra.mxu0 0.0
    %2360 = vmatprep.subr.mxu0 0.0
    %2361 = vmatpush1.msra.mxu0 0.0
    %2362 = vmatprep.subr.mxu0 0.0
    %2363 = vmatpush1.msra.mxu0 0.0
    %2364 = vmatprep.subr.mxu0 0.0
    %2365 = vmatpush1.msra.mxu0 0.0
    %2366 = vmatprep.subr.mxu0 0.0
    %2367 = vmatpush1.msra.mxu0 0.0
    %2368 = vmatprep.subr.mxu0 0.0
    %2369 = vmatpush1.msra.mxu0 0.0
    %2370 = vmatprep.subr.mxu0 0.0
    %2371 = vmatpush1.msra.mxu0 0.0
    %2372 = vmatprep.subr.mxu0 0.0
    %2373 = vmatpush1.msra.mxu0 0.0
    %2374 = vmatprep.subr.mxu0 0.0
    %2375 = vmatpush1.msra.mxu0 0.0
    %2376 = vmatprep.subr.mxu0 0.0
    %2377 = vmatpush1.msra.mxu0 0.0
    %2378 = vmatprep.subr.mxu0 0.0
    %2379 = vmatpush1.msra.mxu0 0.0
    %2380 = vmatprep.subr.mxu0 0.0
    %2381 = vmatpush1.msra.mxu0 0.0
    %2382 = vmatprep.subr.mxu0 0.0
    %2383 = vmatpush1.msra.mxu0 0.0
    %2384 = vmatprep.subr.mxu0 0.0
    %2385 = vmatpush1.msra.mxu0 0.0
    %2386 = vmatprep.subr.mxu0 0.0
    %2387 = vmatpush1.msra.mxu0 0.0
    %2388 = vmatprep.subr.mxu0 0.0
    %2389 = vmatpush1.msra.mxu0 0.0
    %2390 = vmatprep.subr.mxu0 0.0
    %2391 = vmatpush1.msra.mxu0 0.0
    %2392 = vmatprep.subr.mxu0 0.0
    %2393 = vmatpush1.msra.mxu0 0.0
    %2394 = vmatprep.subr.mxu0 0.0
    %2395 = vmatpush1.msra.mxu0 0.0
    %2396 = vmatprep.subr.mxu0 0.0
    %2397 = vmatpush1.msra.mxu0 0.0
    %2398 = vmatprep.subr.mxu0 0.0
    %2399 = vmatpush1.msra.mxu0 0.0
    %2400 = vmatprep.mubr.f32.mxu0 0.0
    %2401 = vmatmul.mubr.f32.gmra.mrb[0].mxu0 %v2334
    %v2402 = vpop.f32.mrb[0].mxu0
    %v2403 = vadd.f32 %v2327, %v2402
    %v2404 = vpop.f32.mrb[0].mxu0
    %2405 = vdwg.mxu0
    %vm2406 = vcmask 58368
    %v2407 = vsel %vm2406, %v2403, -inf
    %2408 = vmax.xlane.f32.xlu0 %v2407
    %v2409 = vpop.xlane.xlu0 %2408
    %v2410 = vsub.f32 %v2403, %v2409
    %v2411 = vmul.f32 %v2410, 1.442695
    %v2412 = vpow.pop %v2411
    %v2413 = vsel %vm2406, %v2412, 0.0
    %2414 = vadd.xlane.f32.xlu0 %v2413
    %v2415 = vpop.xlane.xlu0 %2414
    %v2416 = vrcp.pop %v2415
    %v2417 = vmul.f32 %v2412, %v2416
    %2418 = vst.msk [vmem:[#allocation7] sm:$0x3] %vm2406, %v2417
    // Predicated region
    $region18: #{stock_price_transformer.1} parent=1 // pred_check
      _
    $region19: #{stock_price_transformer.1} parent=1 // pred_check_branch
      %2420 = sbr.rel (0) target = $region21
    $region20: #{stock_price_transformer.1} parent=1 // pred_region
      %s2422 = ssub.s32 32, 32
      %2423 = vsyncadd [#allocation4], %s2422
      %s2425 = sshll.u32 [#allocation7], 4
      %s2426 = int_to_ptr.vmem [resolvable:$true] %s2425
      %2428 = dma.vmem_to_hbm [thread:$0]  %s2426, 32, %s2, [#allocation4]
    $region21: #{stock_price_transformer.1} parent=1 // pred_fallthru
      _
    // Predicated region
    $region22: #{stock_price_transformer.1} parent=1 // pred_check
      _
    $region23: #{stock_price_transformer.1} parent=1 // pred_check_branch
      %2430 = sbr.rel (0) target = $region25
    $region24: #{stock_price_transformer.1} parent=1 // pred_region
      %2431 = dma.done [#allocation4], 32
    $region25: #{stock_price_transformer.1} parent=1 // pred_fallthru
      _
    %2432 = vsyncpa [#allocation3], 1
    %2433 = vsyncpa [#allocation6], 1
    %2434 = vsyncpa [#allocation4], 1

</llo_original>
